<compile_context>
chip_gen: v5e
topology: v5e:2x2
jax: 0.10.0
libtpu: 0.0.40
codegen_flags: <defaults>
</compile_context>

<pallas_src>
import math

import jax
import jax.numpy as jnp
from jax import lax
from jax.experimental import pallas as pl
from jax.experimental.pallas import tpu as pltpu

NUM_GROUPS = 32
EPS = 1e-6
# Explicit scoped-VMEM budget; fits physical VMEM on v5e/v6e (128 MiB) and
# v7x (64 MiB).
VMEM_LIMIT_BYTES = 64 * 1024 * 1024


def _token_tile(n):
    """Lane/sublane friendly token tile (multiple of 128 when possible)."""
    for t in (256, 128):
        if n > t and n % t == 0:
            return t
    return n


# --------------------------------------------------------------------------
# pass 1: GroupNorm + q/k/v projections (k emitted pre-transposed)
# --------------------------------------------------------------------------
def _proj_kernel(x_ref, mean_ref, inv_ref, gamma_ref, beta_ref,
                 wq_ref, bq_ref, wk_ref, bk_ref, wv_ref, bv_ref,
                 q_ref, kt_ref, v_ref):
    x = x_ref[0]                                                   # (tn, C) f32
    h = (x - mean_ref[0]) * inv_ref[0] * gamma_ref[...] + beta_ref[...]
    hb = h.astype(jnp.bfloat16)                                    # MXU operand

    q = jnp.dot(hb, wq_ref[...], preferred_element_type=jnp.float32) + bq_ref[...]
    k = jnp.dot(hb, wk_ref[...], preferred_element_type=jnp.float32) + bk_ref[...]
    v = jnp.dot(hb, wv_ref[...], preferred_element_type=jnp.float32) + bv_ref[...]

    q_ref[0] = q.astype(jnp.bfloat16)
    # One transpose here (amortized over all q tiles) instead of a transposed
    # contraction inside the attention kernel.
    kt_ref[0] = k.T.astype(jnp.bfloat16)
    v_ref[0] = v.astype(jnp.bfloat16)


# --------------------------------------------------------------------------
# pass 2: flash attention (online softmax) + proj_out + residual
# --------------------------------------------------------------------------
def _flash_kernel(x_ref, q_ref, kt_ref, v_ref, wp_ref, bp_ref,
                  o_ref, m_sc, l_sc, acc_sc):
    kv = pl.program_id(2)

    @pl.when(kv == 0)
    def _():
        m_sc[...] = jnp.full_like(m_sc, -jnp.inf)
        l_sc[...] = jnp.zeros_like(l_sc)
        acc_sc[...] = jnp.zeros_like(acc_sc)

    # (tq, C) x (C, tk) -> (tq, tk); the 1/sqrt(C) scale is folded into q.
    s = jnp.dot(q_ref[0], kt_ref[0], preferred_element_type=jnp.float32)

    m_prev = m_sc[...]
    m_new = jnp.maximum(m_prev, jnp.max(s, axis=-1, keepdims=True))
    alpha = jnp.exp(m_prev - m_new)
    p = jnp.exp(s - m_new)
    l_sc[...] = alpha * l_sc[...] + jnp.sum(p, axis=-1, keepdims=True)
    acc_sc[...] = alpha * acc_sc[...] + jnp.dot(
        p.astype(jnp.bfloat16), v_ref[0], preferred_element_type=jnp.float32)
    m_sc[...] = m_new

    @pl.when(kv == pl.num_programs(2) - 1)
    def _():
        out = acc_sc[...] * pl.reciprocal(l_sc[...], approx=True)   # (tq, C)
        proj = jnp.dot(out.astype(jnp.bfloat16), wp_ref[...],
                       preferred_element_type=jnp.float32) + bp_ref[...]
        o_ref[0] = x_ref[0] + proj                                  # residual


# --------------------------------------------------------------------------
# wrappers
# --------------------------------------------------------------------------
def mem_eff_attn_block_tokens(x_bnc, params):
    """Core entry point on token-major (B, N, C) activations.

    Callers that can keep activations token-major should use this directly and
    avoid the two full HBM transpose passes of the NCHW wrapper below.
    """
    B, N, C = x_bnc.shape
    G = NUM_GROUPS
    assert C % G == 0
    cs = C // G

    x_bnc = x_bnc.astype(jnp.float32)
    tn = _token_tile(N)
    tq = tk = tn
    assert N % tn == 0

    # ---- GroupNorm statistics (two-pass mean/var, f32) --------------------
    xg = x_bnc.reshape(B, N, G, cs)
    g_mean = jnp.mean(xg, axis=(1, 3))                 # (B, G)
    g_var = jnp.var(xg, axis=(1, 3))                   # (B, G)
    g_inv = lax.rsqrt(g_var + EPS)
    chan_mean = jnp.repeat(g_mean, cs, axis=1).reshape(B, 1, C)
    chan_inv = jnp.repeat(g_inv, cs, axis=1).reshape(B, 1, C)

    # ---- parameter packing: (C_in, C_out) weights as bf16 MXU operands,
    # softmax scale folded into Wq / bq ------------------------------------
    scale = 1.0 / math.sqrt(C)
    wq_t = (params["wq"].T * scale).astype(jnp.bfloat16)
    wk_t = params["wk"].T.astype(jnp.bfloat16)
    wv_t = params["wv"].T.astype(jnp.bfloat16)
    wp_t = params["wp"].T.astype(jnp.bfloat16)
    bq = (params["bq"] * scale).reshape(1, C).astype(jnp.float32)
    bk = params["bk"].reshape(1, C).astype(jnp.float32)
    bv = params["bv"].reshape(1, C).astype(jnp.float32)
    bp = params["bp"].reshape(1, C).astype(jnp.float32)
    gamma = params["gamma"].reshape(1, C).astype(jnp.float32)
    beta = params["beta"].reshape(1, C).astype(jnp.float32)

    # Constant index_map => weights/biases stay VMEM-resident across the grid.
    rep = lambda shape: pl.BlockSpec(shape, lambda *args: (0,) * len(shape))

    # ---- pass 1: projections ----------------------------------------------
    q, kt, v = pl.pallas_call(
        _proj_kernel,
        out_shape=(
            jax.ShapeDtypeStruct((B, N, C), jnp.bfloat16),   # q (scaled)
            jax.ShapeDtypeStruct((B, C, N), jnp.bfloat16),   # k^T
            jax.ShapeDtypeStruct((B, N, C), jnp.bfloat16),   # v
        ),
        grid_spec=pltpu.PrefetchScalarGridSpec(
            num_scalar_prefetch=0,
            grid=(B, N // tn),
            in_specs=[
                pl.BlockSpec((1, tn, C), lambda b, t: (b, t, 0)),   # x
                pl.BlockSpec((1, 1, C), lambda b, t: (b, 0, 0)),    # chan mean
                pl.BlockSpec((1, 1, C), lambda b, t: (b, 0, 0)),    # chan rsqrt(var)
                rep((1, C)), rep((1, C)),                           # gamma, beta
                rep((C, C)), rep((1, C)),                           # Wq (scaled), bq
                rep((C, C)), rep((1, C)),                           # Wk, bk
                rep((C, C)), rep((1, C)),                           # Wv, bv
            ],
            out_specs=[
                pl.BlockSpec((1, tn, C), lambda b, t: (b, t, 0)),   # q
                pl.BlockSpec((1, C, tn), lambda b, t: (b, 0, t)),   # k^T
                pl.BlockSpec((1, tn, C), lambda b, t: (b, t, 0)),   # v
            ],
        ),
        compiler_params=pltpu.CompilerParams(
            dimension_semantics=("parallel", "parallel"),
            vmem_limit_bytes=VMEM_LIMIT_BYTES),
    )(x_bnc, chan_mean, chan_inv, gamma, beta,
      wq_t, bq, wk_t, bk, wv_t, bv)

    # ---- pass 2: flash attention + proj_out + residual ---------------------
    out = pl.pallas_call(
        _flash_kernel,
        out_shape=jax.ShapeDtypeStruct((B, N, C), jnp.float32),
        grid_spec=pltpu.PrefetchScalarGridSpec(
            num_scalar_prefetch=0,
            grid=(B, N // tq, N // tk),
            in_specs=[
                pl.BlockSpec((1, tq, C), lambda b, i, j: (b, i, 0)),   # x (residual)
                pl.BlockSpec((1, tq, C), lambda b, i, j: (b, i, 0)),   # q
                pl.BlockSpec((1, C, tk), lambda b, i, j: (b, 0, j)),   # k^T
                pl.BlockSpec((1, tk, C), lambda b, i, j: (b, j, 0)),   # v
                rep((C, C)), rep((1, C)),                              # Wp, bp
            ],
            out_specs=pl.BlockSpec((1, tq, C), lambda b, i, j: (b, i, 0)),
            scratch_shapes=[
                pltpu.VMEM((tq, 1), jnp.float32),   # running max
                pltpu.VMEM((tq, 1), jnp.float32),   # running denominator
                pltpu.VMEM((tq, C), jnp.float32),   # output accumulator
            ],
        ),
        compiler_params=pltpu.CompilerParams(
            dimension_semantics=("parallel", "parallel", "arbitrary"),
            vmem_limit_bytes=VMEM_LIMIT_BYTES),
    )(x_bnc, q, kt, v, wp_t, bp)
    return out


def mem_eff_attn_block(x_nchw, params):
    """NCHW-compatible wrapper matching the PyTorch module interface.

    The two transposes below are full HBM read+write passes of the activation
    tensor; prefer mem_eff_attn_block_tokens when the surrounding model can
    carry activations token-major.
    """
    B, C, H, W = x_nchw.shape
    x_bnc = jnp.transpose(x_nchw.reshape(B, C, H * W), (0, 2, 1))
    out = mem_eff_attn_block_tokens(x_bnc, params)
    return jnp.transpose(out, (0, 2, 1)).reshape(B, C, H, W)


# --------------------------------------------------------------------------
# pure-JAX reference matching the PyTorch forward (f32 throughout)
# --------------------------------------------------------------------------
def reference(x_nchw, params):
    B, C, H, W = x_nchw.shape
    G = NUM_GROUPS
    cs = C // G
    xg = x_nchw.reshape(B, G, cs, H, W)
    mean = xg.mean(axis=(2, 3, 4), keepdims=True)
    var = xg.var(axis=(2, 3, 4), keepdims=True)
    h = ((xg - mean) / jnp.sqrt(var + EPS)).reshape(B, C, H, W)
    h = h * params["gamma"][None, :, None, None] + params["beta"][None, :, None, None]

    def conv1x1(t, w, b):
        return jnp.einsum("bchw,oc->bohw", t, w) + b[None, :, None, None]

    q = conv1x1(h, params["wq"], params["bq"])
    k = conv1x1(h, params["wk"], params["bk"])
    v = conv1x1(h, params["wv"], params["bv"])
    tok = lambda t: jnp.transpose(t.reshape(B, C, H * W), (0, 2, 1))  # b n c
    qf, kf, vf = tok(q), tok(k), tok(v)
    s = jnp.einsum("bnc,bmc->bnm", qf, kf) / math.sqrt(C)
    p = jax.nn.softmax(s, axis=-1)
    out = jnp.einsum("bnm,bmc->bnc", p, vf)
    out = jnp.transpose(out, (0, 2, 1)).reshape(B, C, H, W)
    out = conv1x1(out, params["wp"], params["bp"])
    return x_nchw + out


if __name__ == "__main__":
    key = jax.random.PRNGKey(0)
    # C multiple of 32 (groups) and of 128 (lane-dense); N=256 exercises the
    # multi-tile online-softmax path (2 query tiles x 2 kv tiles).
    B, C, H, W = 2, 128, 16, 16

    keys = jax.random.split(key, 12)
    x = jax.random.normal(keys[0], (B, C, H, W), dtype=jnp.float32)
    params = {
        "gamma": 1.0 + 0.1 * jax.random.normal(keys[1], (C,), dtype=jnp.float32),
        "beta": 0.1 * jax.random.normal(keys[2], (C,), dtype=jnp.float32),
        "wq": 0.05 * jax.random.normal(keys[3], (C, C), dtype=jnp.float32),
        "bq": 0.05 * jax.random.normal(keys[4], (C,), dtype=jnp.float32),
        "wk": 0.05 * jax.random.normal(keys[5], (C, C), dtype=jnp.float32),
        "bk": 0.05 * jax.random.normal(keys[6], (C,), dtype=jnp.float32),
        "wv": 0.05 * jax.random.normal(keys[7], (C, C), dtype=jnp.float32),
        "bv": 0.05 * jax.random.normal(keys[8], (C,), dtype=jnp.float32),
        "wp": 0.05 * jax.random.normal(keys[9], (C, C), dtype=jnp.float32),
        "bp": 0.05 * jax.random.normal(keys[10], (C,), dtype=jnp.float32),
    }

    out = jax.block_until_ready(mem_eff_attn_block(x, params))
    ref = jax.block_until_ready(reference(x, params))

    assert out.shape == (B, C, H, W)
    # bf16 MXU operands + EUP approx reciprocal => tolerance looser than pure f32.
    err = float(jnp.max(jnp.abs(out - ref)))
    assert jnp.allclose(out, ref, atol=2e-2, rtol=2e-2), err
    print("KERNEL_OK")
</pallas_src>

<mosaic_0001>
module attributes {stable_mosaic.version = 11 : i64} {
  func.func @_proj_kernel(%arg0: i32, %arg1: i32, %arg2: memref<1x128x128xf32, #tpu.memory_space<vmem>>, %arg3: memref<1x1x128xf32, #tpu.memory_space<vmem>>, %arg4: memref<1x1x128xf32, #tpu.memory_space<vmem>>, %arg5: memref<1x128xf32, #tpu.memory_space<vmem>>, %arg6: memref<1x128xf32, #tpu.memory_space<vmem>>, %arg7: memref<128x128xbf16, #tpu.memory_space<vmem>>, %arg8: memref<1x128xf32, #tpu.memory_space<vmem>>, %arg9: memref<128x128xbf16, #tpu.memory_space<vmem>>, %arg10: memref<1x128xf32, #tpu.memory_space<vmem>>, %arg11: memref<128x128xbf16, #tpu.memory_space<vmem>>, %arg12: memref<1x128xf32, #tpu.memory_space<vmem>>, %arg13: memref<1x128x128xbf16, #tpu.memory_space<vmem>>, %arg14: memref<1x128x128xbf16, #tpu.memory_space<vmem>>, %arg15: memref<1x128x128xbf16, #tpu.memory_space<vmem>>) attributes {dimension_semantics = [#tpu.dimension_semantics<parallel>, #tpu.dimension_semantics<parallel>], iteration_bounds = array<i64: 2, 2>, scalar_prefetch = 0 : i64, scratch_operands = 0 : i64, tpu.core_type = #tpu.core_type<tc>, window_params = [{transform_indices = @transform_0, window_bounds = array<i64: 1, 128, 128>}, {transform_indices = @transform_1, window_bounds = array<i64: 1, 1, 128>}, {transform_indices = @transform_2, window_bounds = array<i64: 1, 1, 128>}, {pipeline_mode = #tpu.pipeline_mode<synchronous>, transform_indices = @transform_3, window_bounds = array<i64: 1, 128>}, {pipeline_mode = #tpu.pipeline_mode<synchronous>, transform_indices = @transform_4, window_bounds = array<i64: 1, 128>}, {pipeline_mode = #tpu.pipeline_mode<synchronous>, transform_indices = @transform_5, window_bounds = array<i64: 128, 128>}, {pipeline_mode = #tpu.pipeline_mode<synchronous>, transform_indices = @transform_6, window_bounds = array<i64: 1, 128>}, {pipeline_mode = #tpu.pipeline_mode<synchronous>, transform_indices = @transform_7, window_bounds = array<i64: 128, 128>}, {pipeline_mode = #tpu.pipeline_mode<synchronous>, transform_indices = @transform_8, window_bounds = array<i64: 1, 128>}, {pipeline_mode = #tpu.pipeline_mode<synchronous>, transform_indices = @transform_9, window_bounds = array<i64: 128, 128>}, {pipeline_mode = #tpu.pipeline_mode<synchronous>, transform_indices = @transform_10, window_bounds = array<i64: 1, 128>}, {transform_indices = @transform_11, window_bounds = array<i64: 1, 128, 128>}, {transform_indices = @transform_12, window_bounds = array<i64: 1, 128, 128>}, {transform_indices = @transform_13, window_bounds = array<i64: 1, 128, 128>}]} {
    %c0 = arith.constant 0 : index
    %c0_0 = arith.constant 0 : index
    %c0_1 = arith.constant 0 : index
    %0 = vector.load %arg2[%c0, %c0_0, %c0_1] : memref<1x128x128xf32, #tpu.memory_space<vmem>>, vector<1x128x128xf32>
    %1 = vector.shape_cast %0 : vector<1x128x128xf32> to vector<128x128xf32>
    %c0_2 = arith.constant 0 : index
    %c0_3 = arith.constant 0 : index
    %c0_4 = arith.constant 0 : index
    %2 = vector.load %arg3[%c0_2, %c0_3, %c0_4] : memref<1x1x128xf32, #tpu.memory_space<vmem>>, vector<1x1x128xf32>
    %3 = vector.shape_cast %2 : vector<1x1x128xf32> to vector<1x128xf32>
    %4 = vector.broadcast %3 : vector<1x128xf32> to vector<128x128xf32>
    %5 = arith.subf %1, %4 : vector<128x128xf32>
    %c0_5 = arith.constant 0 : index
    %c0_6 = arith.constant 0 : index
    %c0_7 = arith.constant 0 : index
    %6 = vector.load %arg4[%c0_5, %c0_6, %c0_7] : memref<1x1x128xf32, #tpu.memory_space<vmem>>, vector<1x1x128xf32>
    %7 = vector.shape_cast %6 : vector<1x1x128xf32> to vector<1x128xf32>
    %8 = vector.broadcast %7 : vector<1x128xf32> to vector<128x128xf32>
    %9 = arith.mulf %5, %8 : vector<128x128xf32>
    %c0_8 = arith.constant 0 : index
    %c0_9 = arith.constant 0 : index
    %10 = vector.load %arg5[%c0_8, %c0_9] : memref<1x128xf32, #tpu.memory_space<vmem>>, vector<1x128xf32>
    %11 = vector.broadcast %10 : vector<1x128xf32> to vector<128x128xf32>
    %12 = arith.mulf %9, %11 : vector<128x128xf32>
    %c0_10 = arith.constant 0 : index
    %c0_11 = arith.constant 0 : index
    %13 = vector.load %arg6[%c0_10, %c0_11] : memref<1x128xf32, #tpu.memory_space<vmem>>, vector<1x128xf32>
    %14 = vector.broadcast %13 : vector<1x128xf32> to vector<128x128xf32>
    %15 = arith.addf %12, %14 : vector<128x128xf32>
    %16 = arith.truncf %15 : vector<128x128xf32> to vector<128x128xbf16>
    %c0_12 = arith.constant 0 : index
    %c0_13 = arith.constant 0 : index
    %17 = vector.load %arg7[%c0_12, %c0_13] : memref<128x128xbf16, #tpu.memory_space<vmem>>, vector<128x128xbf16>
    %cst = arith.constant dense<0.000000e+00> : vector<128x128xf32>
    %18 = tpu.matmul %16, %17, %cst {dimension_numbers = #tpu.dot_dimension_numbers<[1], [0], [0], [1], [0, 0, 1, 1], [], []>} : vector<128x128xbf16>, vector<128x128xbf16>, vector<128x128xf32> -> vector<128x128xf32>
    %c0_14 = arith.constant 0 : index
    %c0_15 = arith.constant 0 : index
    %19 = vector.load %arg8[%c0_14, %c0_15] : memref<1x128xf32, #tpu.memory_space<vmem>>, vector<1x128xf32>
    %20 = vector.broadcast %19 : vector<1x128xf32> to vector<128x128xf32>
    %21 = arith.addf %18, %20 : vector<128x128xf32>
    %c0_16 = arith.constant 0 : index
    %c0_17 = arith.constant 0 : index
    %22 = vector.load %arg9[%c0_16, %c0_17] : memref<128x128xbf16, #tpu.memory_space<vmem>>, vector<128x128xbf16>
    %cst_18 = arith.constant dense<0.000000e+00> : vector<128x128xf32>
    %23 = tpu.matmul %16, %22, %cst_18 {dimension_numbers = #tpu.dot_dimension_numbers<[1], [0], [0], [1], [0, 0, 1, 1], [], []>} : vector<128x128xbf16>, vector<128x128xbf16>, vector<128x128xf32> -> vector<128x128xf32>
    %c0_19 = arith.constant 0 : index
    %c0_20 = arith.constant 0 : index
    %24 = vector.load %arg10[%c0_19, %c0_20] : memref<1x128xf32, #tpu.memory_space<vmem>>, vector<1x128xf32>
    %25 = vector.broadcast %24 : vector<1x128xf32> to vector<128x128xf32>
    %26 = arith.addf %23, %25 : vector<128x128xf32>
    %c0_21 = arith.constant 0 : index
    %c0_22 = arith.constant 0 : index
    %27 = vector.load %arg11[%c0_21, %c0_22] : memref<128x128xbf16, #tpu.memory_space<vmem>>, vector<128x128xbf16>
    %cst_23 = arith.constant dense<0.000000e+00> : vector<128x128xf32>
    %28 = tpu.matmul %16, %27, %cst_23 {dimension_numbers = #tpu.dot_dimension_numbers<[1], [0], [0], [1], [0, 0, 1, 1], [], []>} : vector<128x128xbf16>, vector<128x128xbf16>, vector<128x128xf32> -> vector<128x128xf32>
    %c0_24 = arith.constant 0 : index
    %c0_25 = arith.constant 0 : index
    %29 = vector.load %arg12[%c0_24, %c0_25] : memref<1x128xf32, #tpu.memory_space<vmem>>, vector<1x128xf32>
    %30 = vector.broadcast %29 : vector<1x128xf32> to vector<128x128xf32>
    %31 = arith.addf %28, %30 : vector<128x128xf32>
    %32 = arith.truncf %21 : vector<128x128xf32> to vector<128x128xbf16>
    %c0_26 = arith.constant 0 : index
    %c0_27 = arith.constant 0 : index
    %c0_28 = arith.constant 0 : index
    %33 = vector.load %arg13[%c0_26, %c0_27, %c0_28] : memref<1x128x128xbf16, #tpu.memory_space<vmem>>, vector<1x128x128xbf16>
    %34 = vector.shape_cast %33 : vector<1x128x128xbf16> to vector<128x128xbf16>
    %35 = vector.shape_cast %32 : vector<128x128xbf16> to vector<1x128x128xbf16>
    tpu.vector_store %arg13[%c0_26, %c0_27, %c0_28], %35 {strides = array<i32>} : memref<1x128x128xbf16, #tpu.memory_space<vmem>>, vector<1x128x128xbf16>,
    %36 = tpu.transpose %26, [1, 0] : vector<128x128xf32> -> vector<128x128xf32>
    %37 = arith.truncf %36 : vector<128x128xf32> to vector<128x128xbf16>
    %c0_29 = arith.constant 0 : index
    %c0_30 = arith.constant 0 : index
    %c0_31 = arith.constant 0 : index
    %38 = vector.load %arg14[%c0_29, %c0_30, %c0_31] : memref<1x128x128xbf16, #tpu.memory_space<vmem>>, vector<1x128x128xbf16>
    %39 = vector.shape_cast %38 : vector<1x128x128xbf16> to vector<128x128xbf16>
    %40 = vector.shape_cast %37 : vector<128x128xbf16> to vector<1x128x128xbf16>
    tpu.vector_store %arg14[%c0_29, %c0_30, %c0_31], %40 {strides = array<i32>} : memref<1x128x128xbf16, #tpu.memory_space<vmem>>, vector<1x128x128xbf16>,
    %41 = arith.truncf %31 : vector<128x128xf32> to vector<128x128xbf16>
    %c0_32 = arith.constant 0 : index
    %c0_33 = arith.constant 0 : index
    %c0_34 = arith.constant 0 : index
    %42 = vector.load %arg15[%c0_32, %c0_33, %c0_34] : memref<1x128x128xbf16, #tpu.memory_space<vmem>>, vector<1x128x128xbf16>
    %43 = vector.shape_cast %42 : vector<1x128x128xbf16> to vector<128x128xbf16>
    %44 = vector.shape_cast %41 : vector<128x128xbf16> to vector<1x128x128xbf16>
    tpu.vector_store %arg15[%c0_32, %c0_33, %c0_34], %44 {strides = array<i32>} : memref<1x128x128xbf16, #tpu.memory_space<vmem>>, vector<1x128x128xbf16>,
    return
  }
  func.func @transform_0(%arg0: i32, %arg1: i32) -> (i32, i32, i32) {
    %c0_i32 = arith.constant 0 : i32
    %c0_i32_0 = arith.constant 0 : i32
    return %arg0, %arg1, %c0_i32 : i32, i32, i32
  }
  func.func @transform_1(%arg0: i32, %arg1: i32) -> (i32, i32, i32) {
    %c0_i32 = arith.constant 0 : i32
    %c0_i32_0 = arith.constant 0 : i32
    %c0_i32_1 = arith.constant 0 : i32
    return %arg0, %c0_i32, %c0_i32_0 : i32, i32, i32
  }
  func.func @transform_2(%arg0: i32, %arg1: i32) -> (i32, i32, i32) {
    %c0_i32 = arith.constant 0 : i32
    %c0_i32_0 = arith.constant 0 : i32
    %c0_i32_1 = arith.constant 0 : i32
    return %arg0, %c0_i32, %c0_i32_0 : i32, i32, i32
  }
  func.func @transform_3(%arg0: i32, %arg1: i32) -> (i32, i32) {
    %c0_i32 = arith.constant 0 : i32
    %c0_i32_0 = arith.constant 0 : i32
    %c0_i32_1 = arith.constant 0 : i32
    return %c0_i32, %c0_i32_0 : i32, i32
  }
  func.func @transform_4(%arg0: i32, %arg1: i32) -> (i32, i32) {
    %c0_i32 = arith.constant 0 : i32
    %c0_i32_0 = arith.constant 0 : i32
    %c0_i32_1 = arith.constant 0 : i32
    return %c0_i32, %c0_i32_0 : i32, i32
  }
  func.func @transform_5(%arg0: i32, %arg1: i32) -> (i32, i32) {
    %c0_i32 = arith.constant 0 : i32
    %c0_i32_0 = arith.constant 0 : i32
    %c0_i32_1 = arith.constant 0 : i32
    return %c0_i32, %c0_i32_0 : i32, i32
  }
  func.func @transform_6(%arg0: i32, %arg1: i32) -> (i32, i32) {
    %c0_i32 = arith.constant 0 : i32
    %c0_i32_0 = arith.constant 0 : i32
    %c0_i32_1 = arith.constant 0 : i32
    return %c0_i32, %c0_i32_0 : i32, i32
  }
  func.func @transform_7(%arg0: i32, %arg1: i32) -> (i32, i32) {
    %c0_i32 = arith.constant 0 : i32
    %c0_i32_0 = arith.constant 0 : i32
    %c0_i32_1 = arith.constant 0 : i32
    return %c0_i32, %c0_i32_0 : i32, i32
  }
  func.func @transform_8(%arg0: i32, %arg1: i32) -> (i32, i32) {
    %c0_i32 = arith.constant 0 : i32
    %c0_i32_0 = arith.constant 0 : i32
    %c0_i32_1 = arith.constant 0 : i32
    return %c0_i32, %c0_i32_0 : i32, i32
  }
  func.func @transform_9(%arg0: i32, %arg1: i32) -> (i32, i32) {
    %c0_i32 = arith.constant 0 : i32
    %c0_i32_0 = arith.constant 0 : i32
    %c0_i32_1 = arith.constant 0 : i32
    return %c0_i32, %c0_i32_0 : i32, i32
  }
  func.func @transform_10(%arg0: i32, %arg1: i32) -> (i32, i32) {
    %c0_i32 = arith.constant 0 : i32
    %c0_i32_0 = arith.constant 0 : i32
    %c0_i32_1 = arith.constant 0 : i32
    return %c0_i32, %c0_i32_0 : i32, i32
  }
  func.func @transform_11(%arg0: i32, %arg1: i32) -> (i32, i32, i32) {
    %c0_i32 = arith.constant 0 : i32
    %c0_i32_0 = arith.constant 0 : i32
    return %arg0, %arg1, %c0_i32 : i32, i32, i32
  }
  func.func @transform_12(%arg0: i32, %arg1: i32) -> (i32, i32, i32) {
    %c0_i32 = arith.constant 0 : i32
    %c0_i32_0 = arith.constant 0 : i32
    return %arg0, %c0_i32, %arg1 : i32, i32, i32
  }
  func.func @transform_13(%arg0: i32, %arg1: i32) -> (i32, i32, i32) {
    %c0_i32 = arith.constant 0 : i32
    %c0_i32_0 = arith.constant 0 : i32
    return %arg0, %arg1, %c0_i32 : i32, i32, i32
  }
}

</mosaic_0001>

<llo_original>
// kernel: tpu_custom_call.1
$region0: #{tpu_custom_call.1}
  #allocation0 [shape = 'u32[]', space=smem, size = 0x4, offset = 0x4, fixed_abs, tag = 'smem constant byte address 0x4 - core index']
  #allocation1 [shape = 'u32[72,128]{1,0:T(1,128)}', space=vmem, size = 0x9000, scoped, tag = 'internal scratch']
  %s0 = inlined_call_operand.hbm [shape: f32[2,256,128], index: 0, kind: input, shape index: {}]
  %s1 = inlined_call_operand.hbm [shape: f32[2,1,128], index: 1, kind: input, shape index: {}]
  %s2 = inlined_call_operand.hbm [shape: f32[2,1,128], index: 2, kind: input, shape index: {}]
  %s3 = inlined_call_operand.vmem [shape: f32[1,128], index: 3, kind: input, shape index: {}]
  %s4 = inlined_call_operand.vmem [shape: f32[1,128], index: 4, kind: input, shape index: {}]
  %s5 = inlined_call_operand.hbm [shape: bf16[128,128], index: 5, kind: input, shape index: {}]
  %s6 = inlined_call_operand.vmem [shape: f32[1,128], index: 6, kind: input, shape index: {}]
  %s7 = inlined_call_operand.hbm [shape: bf16[128,128], index: 7, kind: input, shape index: {}]
  %s8 = inlined_call_operand.vmem [shape: f32[1,128], index: 8, kind: input, shape index: {}]
  %s9 = inlined_call_operand.hbm [shape: bf16[128,128], index: 9, kind: input, shape index: {}]
  %s10 = inlined_call_operand.vmem [shape: f32[1,128], index: 10, kind: input, shape index: {}]
  %s11 = inlined_call_operand.hbm [shape: bf16[2,256,128], index: 11, kind: output, shape index: {0}]
  %s12 = inlined_call_operand.hbm [shape: bf16[2,128,256], index: 12, kind: output, shape index: {1}]
  %s13 = inlined_call_operand.hbm [shape: bf16[2,256,128], index: 13, kind: output, shape index: {2}]
  %14 = xla_tuple %s11, %s12, %s13
  %s15 = sld [smem:[#allocation0]]
  $region117: #{tpu_custom_call.1} parent=0
    _
  %s17 = ssub.s32 1, %s15
  %s18 = scalar_select 0, %s17, %s15
  $region1: #{tpu_custom_call.1} parent=0
    #allocation2 [shape = 'u8[131072]{0}', space=vmem, size = 0x20000, scoped, tag = 'input window, operand 0']
    #allocation3 [shape = 's32[2]{0}', space=sflag, size = 0x8, scoped, tag = 'scoped memory for tpu_custom_call.1']
    #allocation4 [shape = 's32[2]{0}', space=sflag, size = 0x8, scoped, tag = 'scoped memory for tpu_custom_call.1']
    #allocation5 [shape = 'u8[1024]{0}', space=vmem, size = 0x400, scoped, tag = 'input window, operand 1']
    #allocation6 [shape = 's32[2]{0}', space=sflag, size = 0x8, scoped, tag = 'scoped memory for tpu_custom_call.1']
    #allocation7 [shape = 'u8[1024]{0}', space=vmem, size = 0x400, scoped, tag = 'input window, operand 2']
    #allocation8 [shape = 'u8[32768]{0}', space=vmem, size = 0x8000, scoped, tag = 'input window, operand 5, single buffered']
    #allocation9 [shape = 's32[1]{0}', space=sflag, size = 0x4, scoped, tag = 'scoped memory for tpu_custom_call.1']
    #allocation10 [shape = 'u8[32768]{0}', space=vmem, size = 0x8000, scoped, tag = 'input window, operand 7, single buffered']
    #allocation11 [shape = 'u8[32768]{0}', space=vmem, size = 0x8000, scoped, tag = 'input window, operand 9, single buffered']
    #allocation12 [shape = 's32[1]{0}', space=sflag, size = 0x4, scoped, tag = 'scoped memory for tpu_custom_call.1']
    #allocation13 [shape = 'u8[65536]{0}', space=vmem, size = 0x10000, scoped, tag = 'output window, operand 0']
    #allocation14 [shape = 'u8[65536]{0}', space=vmem, size = 0x10000, scoped, tag = 'output window, operand 1']
    #allocation15 [shape = 's32[2]{0}', space=sflag, size = 0x8, scoped, tag = 'scoped memory for tpu_custom_call.1']
    #allocation16 [shape = 'u8[65536]{0}', space=vmem, size = 0x10000, scoped, tag = 'output window, operand 2']
    %19 = vsyncpa [#allocation3], 0
    %s20 = scalar_lea.sflag [#allocation3], 1
    %21 = vsyncpa %s20, 0
    %22 = vsyncpa [#allocation6], 0
    %s23 = scalar_lea.sflag [#allocation6], 1
    %24 = vsyncpa %s23, 0
    %25 = vsyncpa [#allocation9], 0
    %26 = vsyncpa [#allocation12], 0
    %27 = vsyncpa [#allocation4], 0
    %s28 = scalar_lea.sflag [#allocation4], 1
    %29 = vsyncpa %s28, 0
    %30 = vsyncpa [#allocation15], 0
    %s31 = scalar_lea.sflag [#allocation15], 1
    %32 = vsyncpa %s31, 0
    loop: start=0, step=1, limit=6
    $region2: #{tpu_custom_call.1} parent=1 // loop_pre_header
      _
    $region3: #{tpu_custom_call.1} parent=1 // loop_header
      %s34 = sphi 0, %s38
      %p35 = scmp.ge.s32.totalorder %s34, 6
      %s41 = sphi 0, %s53
      %s42 = sphi 0, %s49
      %s43 = sphi 0, %s41
      %s44 = sphi 0, %s42
      %s45 = sphi 0, %s43
      %s46 = sphi 0, %s44
      %s58 = sphi 0, %s60
      %s61 = sphi 0, %s58
      %s62 = sphi 0, %s61
      %s78 = sphi 0, %s62
      %s84 = sphi 0, %s86
      %s87 = sphi 0, %s84
      %s88 = sphi 0, %s87
      %s104 = sphi 0, %s88
      %s110 = sphi 0, %s112
      %s113 = sphi 0, %s110
      %s114 = sphi 0, %s113
      %s130 = sphi 0, %s114
      %s134 = sphi 0, %s134
      %s136 = sphi 0, %s134
      %s137 = sphi 0, %s136
      %s151 = sphi 0, %s137
      %s155 = sphi 0, %s155
      %s157 = sphi 0, %s155
      %s158 = sphi 0, %s157
      %s172 = sphi 0, %s158
      %s176 = sphi 0, %s176
      %s178 = sphi 0, %s176
      %s179 = sphi 0, %s178
      %s193 = sphi 0, %s179
      %s197 = sphi 0, %s197
      %s199 = sphi 0, %s197
      %s200 = sphi 0, %s199
      %s214 = sphi 0, %s200
      %s218 = sphi 0, %s218
      %s220 = sphi 0, %s218
      %s221 = sphi 0, %s220
      %s235 = sphi 0, %s221
      %s239 = sphi 0, %s239
      %s241 = sphi 0, %s239
      %s242 = sphi 0, %s241
      %s256 = sphi 0, %s242
      %s260 = sphi 0, %s260
      %s262 = sphi 0, %s260
      %s263 = sphi 0, %s262
      %s277 = sphi 0, %s263
      %s281 = sphi 0, %s281
      %s283 = sphi 0, %s281
      %s284 = sphi 0, %s283
      %s298 = sphi 0, %s284
      %s306 = sphi 0, %s308
      %s309 = sphi 0, %s306
      %s310 = sphi 0, %s309
      %s326 = sphi 0, %s310
      %s334 = sphi 0, %s336
      %s337 = sphi 0, %s334
      %s338 = sphi 0, %s337
      %s354 = sphi 0, %s338
      %s362 = sphi 0, %s364
      %s365 = sphi 0, %s362
      %s366 = sphi 0, %s365
      %s382 = sphi 0, %s366
    $region4: #{tpu_custom_call.1} parent=1 // loop_header_branch
      %37 = sbr.rel (%p35) target = $region8
    $region5: #{tpu_custom_call.1} parent=1 // loop_body
      %s39 = ssub.s32 %s34, 1
      %s40 = ssub.s32 %s34, 2
      %s47 = sadd.s32 1, %s42
      %p48 = scmp.ge.s32.totalorder %s47, 2
      %s49 = scalar_select %p48, 0, %s47
      %s50 = sadd.s32 1, %s41
      %s51 = scalar_select %p48, %s50, %s41
      %p52 = scmp.ge.s32.totalorder %s51, 2
      %s53 = scalar_select %p52, 0, %s51
      %s54 = ssub.s32 %s41, %s53
      %s55 = ssub.s32 %s42, %s49
      %s56 = sor.u32 %s54, %s55
      %p57 = scmp.eq.s32.totalorder %s56, 0
      %s59 = sadd.s32 %s58, 1
      %s60 = scalar_select %p57, %s58, %s59
      %p63 = pneg %p57
      %p64 = scmp.eq.s32.totalorder %s34, 3
      %p65 = por %p63, %p64
      %p66 = scmp.ne.s32.totalorder %s58, %s61
      %p67 = scmp.eq.s32.totalorder %s34, 0
      %p68 = por %p66, %p67
      %p69 = scmp.ne.s32.totalorder %s58, %s61
      %p70 = scmp.eq.s32.totalorder %s39, 3
      %p71 = por %p69, %p70
      %p72 = scmp.ne.s32.totalorder %s61, %s62
      %p73 = scmp.eq.s32.totalorder %s39, 0
      %p74 = por %p72, %p73
      %p75 = scmp.ne.s32.totalorder %s61, %s62
      %p76 = scmp.eq.s32.totalorder %s40, 3
      %p77 = por %p75, %p76
      %p79 = scmp.ne.s32.totalorder %s62, %s78
      %p80 = scmp.eq.s32.totalorder %s40, 0
      %p81 = por %p79, %p80
      %s82 = ssub.s32 %s41, %s53
      %p83 = scmp.eq.s32.totalorder %s82, 0
      %s85 = sadd.s32 %s84, 1
      %s86 = scalar_select %p83, %s84, %s85
      %p89 = pneg %p83
      %p90 = scmp.eq.s32.totalorder %s34, 3
      %p91 = por %p89, %p90
      %p92 = scmp.ne.s32.totalorder %s84, %s87
      %p93 = scmp.eq.s32.totalorder %s34, 0
      %p94 = por %p92, %p93
      %p95 = scmp.ne.s32.totalorder %s84, %s87
      %p96 = scmp.eq.s32.totalorder %s39, 3
      %p97 = por %p95, %p96
      %p98 = scmp.ne.s32.totalorder %s87, %s88
      %p99 = scmp.eq.s32.totalorder %s39, 0
      %p100 = por %p98, %p99
      %p101 = scmp.ne.s32.totalorder %s87, %s88
      %p102 = scmp.eq.s32.totalorder %s40, 3
      %p103 = por %p101, %p102
      %p105 = scmp.ne.s32.totalorder %s88, %s104
      %p106 = scmp.eq.s32.totalorder %s40, 0
      %p107 = por %p105, %p106
      %s108 = ssub.s32 %s41, %s53
      %p109 = scmp.eq.s32.totalorder %s108, 0
      %s111 = sadd.s32 %s110, 1
      %s112 = scalar_select %p109, %s110, %s111
      %p115 = pneg %p109
      %p116 = scmp.eq.s32.totalorder %s34, 3
      %p117 = por %p115, %p116
      %p118 = scmp.ne.s32.totalorder %s110, %s113
      %p119 = scmp.eq.s32.totalorder %s34, 0
      %p120 = por %p118, %p119
      %p121 = scmp.ne.s32.totalorder %s110, %s113
      %p122 = scmp.eq.s32.totalorder %s39, 3
      %p123 = por %p121, %p122
      %p124 = scmp.ne.s32.totalorder %s113, %s114
      %p125 = scmp.eq.s32.totalorder %s39, 0
      %p126 = por %p124, %p125
      %p127 = scmp.ne.s32.totalorder %s113, %s114
      %p128 = scmp.eq.s32.totalorder %s40, 3
      %p129 = por %p127, %p128
      %p131 = scmp.ne.s32.totalorder %s114, %s130
      %p132 = scmp.eq.s32.totalorder %s40, 0
      %p133 = por %p131, %p132
      %s135 = sadd.s32 %s134, 1
      %p138 = scmp.eq.s32.totalorder %s34, 3
      %p139 = scmp.ne.s32.totalorder %s134, %s136
      %p140 = scmp.eq.s32.totalorder %s34, 0
      %p141 = por %p139, %p140
      %p142 = scmp.ne.s32.totalorder %s134, %s136
      %p143 = scmp.eq.s32.totalorder %s39, 3
      %p144 = por %p142, %p143
      %p145 = scmp.ne.s32.totalorder %s136, %s137
      %p146 = scmp.eq.s32.totalorder %s39, 0
      %p147 = por %p145, %p146
      %p148 = scmp.ne.s32.totalorder %s136, %s137
      %p149 = scmp.eq.s32.totalorder %s40, 3
      %p150 = por %p148, %p149
      %p152 = scmp.ne.s32.totalorder %s137, %s151
      %p153 = scmp.eq.s32.totalorder %s40, 0
      %p154 = por %p152, %p153
      %s156 = sadd.s32 %s155, 1
      %p159 = scmp.eq.s32.totalorder %s34, 3
      %p160 = scmp.ne.s32.totalorder %s155, %s157
      %p161 = scmp.eq.s32.totalorder %s34, 0
      %p162 = por %p160, %p161
      %p163 = scmp.ne.s32.totalorder %s155, %s157
      %p164 = scmp.eq.s32.totalorder %s39, 3
      %p165 = por %p163, %p164
      %p166 = scmp.ne.s32.totalorder %s157, %s158
      %p167 = scmp.eq.s32.totalorder %s39, 0
      %p168 = por %p166, %p167
      %p169 = scmp.ne.s32.totalorder %s157, %s158
      %p170 = scmp.eq.s32.totalorder %s40, 3
      %p171 = por %p169, %p170
      %p173 = scmp.ne.s32.totalorder %s158, %s172
      %p174 = scmp.eq.s32.totalorder %s40, 0
      %p175 = por %p173, %p174
      %s177 = sadd.s32 %s176, 1
      %p180 = scmp.eq.s32.totalorder %s34, 3
      %p181 = scmp.ne.s32.totalorder %s176, %s178
      %p182 = scmp.eq.s32.totalorder %s34, 0
      %p183 = por %p181, %p182
      %p184 = scmp.ne.s32.totalorder %s176, %s178
      %p185 = scmp.eq.s32.totalorder %s39, 3
      %p186 = por %p184, %p185
      %p187 = scmp.ne.s32.totalorder %s178, %s179
      %p188 = scmp.eq.s32.totalorder %s39, 0
      %p189 = por %p187, %p188
      %p190 = scmp.ne.s32.totalorder %s178, %s179
      %p191 = scmp.eq.s32.totalorder %s40, 3
      %p192 = por %p190, %p191
      %p194 = scmp.ne.s32.totalorder %s179, %s193
      %p195 = scmp.eq.s32.totalorder %s40, 0
      %p196 = por %p194, %p195
      %s198 = sadd.s32 %s197, 1
      %p201 = scmp.eq.s32.totalorder %s34, 3
      %p202 = scmp.ne.s32.totalorder %s197, %s199
      %p203 = scmp.eq.s32.totalorder %s34, 0
      %p204 = por %p202, %p203
      %p205 = scmp.ne.s32.totalorder %s197, %s199
      %p206 = scmp.eq.s32.totalorder %s39, 3
      %p207 = por %p205, %p206
      %p208 = scmp.ne.s32.totalorder %s199, %s200
      %p209 = scmp.eq.s32.totalorder %s39, 0
      %p210 = por %p208, %p209
      %p211 = scmp.ne.s32.totalorder %s199, %s200
      %p212 = scmp.eq.s32.totalorder %s40, 3
      %p213 = por %p211, %p212
      %p215 = scmp.ne.s32.totalorder %s200, %s214
      %p216 = scmp.eq.s32.totalorder %s40, 0
      %p217 = por %p215, %p216
      %s219 = sadd.s32 %s218, 1
      %p222 = scmp.eq.s32.totalorder %s34, 3
      %p223 = scmp.ne.s32.totalorder %s218, %s220
      %p224 = scmp.eq.s32.totalorder %s34, 0
      %p225 = por %p223, %p224
      %p226 = scmp.ne.s32.totalorder %s218, %s220
      %p227 = scmp.eq.s32.totalorder %s39, 3
      %p228 = por %p226, %p227
      %p229 = scmp.ne.s32.totalorder %s220, %s221
      %p230 = scmp.eq.s32.totalorder %s39, 0
      %p231 = por %p229, %p230
      %p232 = scmp.ne.s32.totalorder %s220, %s221
      %p233 = scmp.eq.s32.totalorder %s40, 3
      %p234 = por %p232, %p233
      %p236 = scmp.ne.s32.totalorder %s221, %s235
      %p237 = scmp.eq.s32.totalorder %s40, 0
      %p238 = por %p236, %p237
      %s240 = sadd.s32 %s239, 1
      %p243 = scmp.eq.s32.totalorder %s34, 3
      %p244 = scmp.ne.s32.totalorder %s239, %s241
      %p245 = scmp.eq.s32.totalorder %s34, 0
      %p246 = por %p244, %p245
      %p247 = scmp.ne.s32.totalorder %s239, %s241
      %p248 = scmp.eq.s32.totalorder %s39, 3
      %p249 = por %p247, %p248
      %p250 = scmp.ne.s32.totalorder %s241, %s242
      %p251 = scmp.eq.s32.totalorder %s39, 0
      %p252 = por %p250, %p251
      %p253 = scmp.ne.s32.totalorder %s241, %s242
      %p254 = scmp.eq.s32.totalorder %s40, 3
      %p255 = por %p253, %p254
      %p257 = scmp.ne.s32.totalorder %s242, %s256
      %p258 = scmp.eq.s32.totalorder %s40, 0
      %p259 = por %p257, %p258
      %s261 = sadd.s32 %s260, 1
      %p264 = scmp.eq.s32.totalorder %s34, 3
      %p265 = scmp.ne.s32.totalorder %s260, %s262
      %p266 = scmp.eq.s32.totalorder %s34, 0
      %p267 = por %p265, %p266
      %p268 = scmp.ne.s32.totalorder %s260, %s262
      %p269 = scmp.eq.s32.totalorder %s39, 3
      %p270 = por %p268, %p269
      %p271 = scmp.ne.s32.totalorder %s262, %s263
      %p272 = scmp.eq.s32.totalorder %s39, 0
      %p273 = por %p271, %p272
      %p274 = scmp.ne.s32.totalorder %s262, %s263
      %p275 = scmp.eq.s32.totalorder %s40, 3
      %p276 = por %p274, %p275
      %p278 = scmp.ne.s32.totalorder %s263, %s277
      %p279 = scmp.eq.s32.totalorder %s40, 0
      %p280 = por %p278, %p279
      %s282 = sadd.s32 %s281, 1
      %p285 = scmp.eq.s32.totalorder %s34, 3
      %p286 = scmp.ne.s32.totalorder %s281, %s283
      %p287 = scmp.eq.s32.totalorder %s34, 0
      %p288 = por %p286, %p287
      %p289 = scmp.ne.s32.totalorder %s281, %s283
      %p290 = scmp.eq.s32.totalorder %s39, 3
      %p291 = por %p289, %p290
      %p292 = scmp.ne.s32.totalorder %s283, %s284
      %p293 = scmp.eq.s32.totalorder %s39, 0
      %p294 = por %p292, %p293
      %p295 = scmp.ne.s32.totalorder %s283, %s284
      %p296 = scmp.eq.s32.totalorder %s40, 3
      %p297 = por %p295, %p296
      %p299 = scmp.ne.s32.totalorder %s284, %s298
      %p300 = scmp.eq.s32.totalorder %s40, 0
      %p301 = por %p299, %p300
      %s302 = ssub.s32 %s41, %s53
      %s303 = ssub.s32 %s42, %s49
      %s304 = sor.u32 %s302, %s303
      %p305 = scmp.eq.s32.totalorder %s304, 0
      %s307 = sadd.s32 %s306, 1
      %s308 = scalar_select %p305, %s306, %s307
      %p311 = pneg %p305
      %p312 = scmp.eq.s32.totalorder %s34, 3
      %p313 = por %p311, %p312
      %p314 = scmp.ne.s32.totalorder %s306, %s309
      %p315 = scmp.eq.s32.totalorder %s34, 0
      %p316 = por %p314, %p315
      %p317 = scmp.ne.s32.totalorder %s306, %s309
      %p318 = scmp.eq.s32.totalorder %s39, 3
      %p319 = por %p317, %p318
      %p320 = scmp.ne.s32.totalorder %s309, %s310
      %p321 = scmp.eq.s32.totalorder %s39, 0
      %p322 = por %p320, %p321
      %p323 = scmp.ne.s32.totalorder %s309, %s310
      %p324 = scmp.eq.s32.totalorder %s40, 3
      %p325 = por %p323, %p324
      %p327 = scmp.ne.s32.totalorder %s310, %s326
      %p328 = scmp.eq.s32.totalorder %s40, 0
      %p329 = por %p327, %p328
      %s330 = ssub.s32 %s41, %s53
      %s331 = ssub.s32 %s42, %s49
      %s332 = sor.u32 %s330, %s331
      %p333 = scmp.eq.s32.totalorder %s332, 0
      %s335 = sadd.s32 %s334, 1
      %s336 = scalar_select %p333, %s334, %s335
      %p339 = pneg %p333
      %p340 = scmp.eq.s32.totalorder %s34, 3
      %p341 = por %p339, %p340
      %p342 = scmp.ne.s32.totalorder %s334, %s337
      %p343 = scmp.eq.s32.totalorder %s34, 0
      %p344 = por %p342, %p343
      %p345 = scmp.ne.s32.totalorder %s334, %s337
      %p346 = scmp.eq.s32.totalorder %s39, 3
      %p347 = por %p345, %p346
      %p348 = scmp.ne.s32.totalorder %s337, %s338
      %p349 = scmp.eq.s32.totalorder %s39, 0
      %p350 = por %p348, %p349
      %p351 = scmp.ne.s32.totalorder %s337, %s338
      %p352 = scmp.eq.s32.totalorder %s40, 3
      %p353 = por %p351, %p352
      %p355 = scmp.ne.s32.totalorder %s338, %s354
      %p356 = scmp.eq.s32.totalorder %s40, 0
      %p357 = por %p355, %p356
      %s358 = ssub.s32 %s41, %s53
      %s359 = ssub.s32 %s42, %s49
      %s360 = sor.u32 %s358, %s359
      %p361 = scmp.eq.s32.totalorder %s360, 0
      %s363 = sadd.s32 %s362, 1
      %s364 = scalar_select %p361, %s362, %s363
      %p367 = pneg %p361
      %p368 = scmp.eq.s32.totalorder %s34, 3
      %p369 = por %p367, %p368
      %p370 = scmp.ne.s32.totalorder %s362, %s365
      %p371 = scmp.eq.s32.totalorder %s34, 0
      %p372 = por %p370, %p371
      %p373 = scmp.ne.s32.totalorder %s362, %s365
      %p374 = scmp.eq.s32.totalorder %s39, 3
      %p375 = por %p373, %p374
      %p376 = scmp.ne.s32.totalorder %s365, %s366
      %p377 = scmp.eq.s32.totalorder %s39, 0
      %p378 = por %p376, %p377
      %p379 = scmp.ne.s32.totalorder %s365, %s366
      %p380 = scmp.eq.s32.totalorder %s40, 3
      %p381 = por %p379, %p380
      %p383 = scmp.ne.s32.totalorder %s366, %s382
      %p384 = scmp.eq.s32.totalorder %s40, 0
      %p385 = por %p383, %p384
      %p386 = scmp.le.s32.totalorder 1, %s34
      %p387 = scmp.lt.s32.totalorder %s34, 5
      %p388 = pnand %p386, %p387
      %p389 = pneg %p388
      // Predicated region
      $region9: #{tpu_custom_call.1} parent=5 // pred_check
        _
      $region10: #{tpu_custom_call.1} parent=5 // pred_check_branch
        %391 = sbr.rel (%p388) target = $region12
      $region11: #{tpu_custom_call.1} parent=5 // pred_region
        %s392 = ssub.s32 %s34, 1
        // Predicated region
        $region13: #{tpu_custom_call.1} parent=11 // pred_check
          %p393 = pneg %p147
        $region14: #{tpu_custom_call.1} parent=11 // pred_check_branch
          %395 = sbr.rel (%p393) target = $region16
        $region15: #{tpu_custom_call.1} parent=11 // pred_region
          _
        $region16: #{tpu_custom_call.1} parent=11 // pred_fallthru
          _
        // Predicated region
        $region17: #{tpu_custom_call.1} parent=11 // pred_check
          %p396 = pneg %p168
        $region18: #{tpu_custom_call.1} parent=11 // pred_check_branch
          %398 = sbr.rel (%p396) target = $region20
        $region19: #{tpu_custom_call.1} parent=11 // pred_region
          _
        $region20: #{tpu_custom_call.1} parent=11 // pred_fallthru
          _
        // Predicated region
        $region21: #{tpu_custom_call.1} parent=11 // pred_check
          %p399 = pneg %p189
        $region22: #{tpu_custom_call.1} parent=11 // pred_check_branch
          %401 = sbr.rel (%p399) target = $region24
        $region23: #{tpu_custom_call.1} parent=11 // pred_region
          %403 = vsyncadd [#allocation9], 0
          %s404 = sshll.u32 %s5, 4
          %s405 = int_to_ptr.hbm [resolvable:$true] %s404
          %s406 = sshll.u32 [#allocation8], 4
          %s407 = int_to_ptr.vmem [resolvable:$true] %s406
          %412 = dma.hbm_to_vmem [thread:$0]  %s405, 1024, %s407, [#allocation9], 64, 64, 4
        $region24: #{tpu_custom_call.1} parent=11 // pred_fallthru
          _
        // Predicated region
        $region25: #{tpu_custom_call.1} parent=11 // pred_check
          %p413 = pneg %p210
        $region26: #{tpu_custom_call.1} parent=11 // pred_check_branch
          %415 = sbr.rel (%p413) target = $region28
        $region27: #{tpu_custom_call.1} parent=11 // pred_region
          _
        $region28: #{tpu_custom_call.1} parent=11 // pred_fallthru
          _
        // Predicated region
        $region29: #{tpu_custom_call.1} parent=11 // pred_check
          %p416 = pneg %p231
        $region30: #{tpu_custom_call.1} parent=11 // pred_check_branch
          %418 = sbr.rel (%p416) target = $region32
        $region31: #{tpu_custom_call.1} parent=11 // pred_region
          %420 = vsyncadd [#allocation9], 0
          %s421 = sshll.u32 %s7, 4
          %s422 = int_to_ptr.hbm [resolvable:$true] %s421
          %s423 = sshll.u32 [#allocation10], 4
          %s424 = int_to_ptr.vmem [resolvable:$true] %s423
          %429 = dma.hbm_to_vmem [thread:$0]  %s422, 1024, %s424, [#allocation9], 64, 64, 4
        $region32: #{tpu_custom_call.1} parent=11 // pred_fallthru
          _
        // Predicated region
        $region33: #{tpu_custom_call.1} parent=11 // pred_check
          %p430 = pneg %p252
        $region34: #{tpu_custom_call.1} parent=11 // pred_check_branch
          %432 = sbr.rel (%p430) target = $region36
        $region35: #{tpu_custom_call.1} parent=11 // pred_region
          _
        $region36: #{tpu_custom_call.1} parent=11 // pred_fallthru
          _
        // Predicated region
        $region37: #{tpu_custom_call.1} parent=11 // pred_check
          %p433 = pneg %p273
        $region38: #{tpu_custom_call.1} parent=11 // pred_check_branch
          %435 = sbr.rel (%p433) target = $region40
        $region39: #{tpu_custom_call.1} parent=11 // pred_region
          %437 = vsyncadd [#allocation12], 0
          %s438 = sshll.u32 %s9, 4
          %s439 = int_to_ptr.hbm [resolvable:$true] %s438
          %s440 = sshll.u32 [#allocation11], 4
          %s441 = int_to_ptr.vmem [resolvable:$true] %s440
          %446 = dma.hbm_to_vmem [thread:$0]  %s439, 1024, %s441, [#allocation12], 64, 64, 4
        $region40: #{tpu_custom_call.1} parent=11 // pred_fallthru
          _
        // Predicated region
        $region41: #{tpu_custom_call.1} parent=11 // pred_check
          %p447 = pneg %p294
        $region42: #{tpu_custom_call.1} parent=11 // pred_check_branch
          %449 = sbr.rel (%p447) target = $region44
        $region43: #{tpu_custom_call.1} parent=11 // pred_region
          _
        $region44: #{tpu_custom_call.1} parent=11 // pred_fallthru
          _
      $region12: #{tpu_custom_call.1} parent=5 // pred_fallthru
        _
      %p450 = scmp.lt.s32.totalorder %s34, 4
      // Predicated region
      $region45: #{tpu_custom_call.1} parent=5 // pred_check
        %p451 = pneg %p450
      $region46: #{tpu_custom_call.1} parent=5 // pred_check_branch
        %453 = sbr.rel (%p451) target = $region48
      $region47: #{tpu_custom_call.1} parent=5 // pred_region
        // Predicated region
        $region49: #{tpu_custom_call.1} parent=47 // pred_check
          %p454 = pneg %p68
        $region50: #{tpu_custom_call.1} parent=47 // pred_check_branch
          %456 = sbr.rel (%p454) target = $region52
        $region51: #{tpu_custom_call.1} parent=47 // pred_region
          %s457 = sand.u32 %s58, 1
          %s458 = scalar_lea.sflag [#allocation3], %s457
          %s459 = sand.u32 %s58, 1
          %s460 = smul.addr %s459, 128
          %s461 = scalar_lea.vmem [#allocation2], %s460
          %s462 = smul.u32 16, %s42
          %464 = vsyncadd %s458, 0
          %s465 = smul.addr %s41, 32
          %s466 = sadd.s32 %s462, %s465
          %s467 = smul.addr %s466, 8
          %s468 = scalar_lea.hbm %s0, %s467
          %s469 = sshll.u32 %s468, 4
          %s470 = int_to_ptr.hbm [resolvable:$true] %s469
          %s471 = sshll.u32 %s461, 4
          %s472 = int_to_ptr.vmem [resolvable:$true] %s471
          %477 = dma.hbm_to_vmem [thread:$0]  %s470, 2048, %s472, %s458, 128, 128, 8
        $region52: #{tpu_custom_call.1} parent=47 // pred_fallthru
          _
        // Predicated region
        $region53: #{tpu_custom_call.1} parent=47 // pred_check
          %p478 = pneg %p94
        $region54: #{tpu_custom_call.1} parent=47 // pred_check_branch
          %480 = sbr.rel (%p478) target = $region56
        $region55: #{tpu_custom_call.1} parent=47 // pred_region
          %s481 = sand.u32 %s34, 1
          %s482 = scalar_lea.sflag [#allocation6], %s481
          %s483 = sand.u32 %s84, 1
          %s484 = scalar_lea.vmem [#allocation5], %s483
          %486 = vsyncadd %s482, 0
          %s487 = scalar_lea.hbm %s1, %s41
          %s489 = sshll.u32 %s487, 4
          %s490 = int_to_ptr.hbm [resolvable:$true] %s489
          %s491 = sshll.u32 %s484, 4
          %s492 = int_to_ptr.vmem [resolvable:$true] %s491
          %494 = dma.hbm_to_vmem [thread:$0]  %s490, 16, %s492, %s482
        $region56: #{tpu_custom_call.1} parent=47 // pred_fallthru
          _
        // Predicated region
        $region57: #{tpu_custom_call.1} parent=47 // pred_check
          %p495 = pneg %p120
        $region58: #{tpu_custom_call.1} parent=47 // pred_check_branch
          %497 = sbr.rel (%p495) target = $region60
        $region59: #{tpu_custom_call.1} parent=47 // pred_region
          %s498 = sand.u32 %s34, 1
          %s499 = scalar_lea.sflag [#allocation6], %s498
          %s500 = sand.u32 %s110, 1
          %s501 = scalar_lea.vmem [#allocation7], %s500
          %503 = vsyncadd %s499, 0
          %s504 = scalar_lea.hbm %s2, %s41
          %s506 = sshll.u32 %s504, 4
          %s507 = int_to_ptr.hbm [resolvable:$true] %s506
          %s508 = sshll.u32 %s501, 4
          %s509 = int_to_ptr.vmem [resolvable:$true] %s508
          %511 = dma.hbm_to_vmem [thread:$0]  %s507, 16, %s509, %s499
        $region60: #{tpu_custom_call.1} parent=47 // pred_fallthru
          _
      $region48: #{tpu_custom_call.1} parent=5 // pred_fallthru
        _
      %p512 = scmp.le.s32.totalorder 1, %s34
      %p513 = scmp.lt.s32.totalorder %s34, 5
      %p514 = pnand %p512, %p513
      %p515 = pneg %p514
      // Predicated region
      $region61: #{tpu_custom_call.1} parent=5 // pred_check
        _
      $region62: #{tpu_custom_call.1} parent=5 // pred_check_branch
        %517 = sbr.rel (%p514) target = $region64
      $region63: #{tpu_custom_call.1} parent=5 // pred_region
        %s518 = ssub.s32 %s34, 1
        %s519 = sand.u32 %s61, 1
        %s520 = scalar_lea.sflag [#allocation3], %s519
        %s521 = sand.u32 %s61, 1
        %s522 = smul.addr %s521, 128
        %s523 = scalar_lea.vmem [#allocation2], %s522
        // Predicated region
        $region65: #{tpu_custom_call.1} parent=63 // pred_check
          %p524 = pneg %p74
        $region66: #{tpu_custom_call.1} parent=63 // pred_check_branch
          %526 = sbr.rel (%p524) target = $region68
        $region67: #{tpu_custom_call.1} parent=63 // pred_region
          %528 = dma.done %s520, 2048
        $region68: #{tpu_custom_call.1} parent=63 // pred_fallthru
          _
        %s529 = sand.u32 %s39, 1
        %s530 = scalar_lea.sflag [#allocation6], %s529
        %s531 = sand.u32 %s87, 1
        %s532 = scalar_lea.vmem [#allocation5], %s531
        // Predicated region
        $region69: #{tpu_custom_call.1} parent=63 // pred_check
          %p533 = pneg %p100
        $region70: #{tpu_custom_call.1} parent=63 // pred_check_branch
          %535 = sbr.rel (%p533) target = $region72
        $region71: #{tpu_custom_call.1} parent=63 // pred_region
          %537 = dma.done %s530, 16
        $region72: #{tpu_custom_call.1} parent=63 // pred_fallthru
          _
        %s538 = sand.u32 %s39, 1
        %s539 = scalar_lea.sflag [#allocation6], %s538
        %s540 = sand.u32 %s113, 1
        %s541 = scalar_lea.vmem [#allocation7], %s540
        // Predicated region
        $region73: #{tpu_custom_call.1} parent=63 // pred_check
          %p542 = pneg %p126
        $region74: #{tpu_custom_call.1} parent=63 // pred_check_branch
          %544 = sbr.rel (%p542) target = $region76
        $region75: #{tpu_custom_call.1} parent=63 // pred_region
          %546 = dma.done %s539, 16
        $region76: #{tpu_custom_call.1} parent=63 // pred_fallthru
          _
        // Predicated region
        $region77: #{tpu_custom_call.1} parent=63 // pred_check
          %p547 = pneg %p189
        $region78: #{tpu_custom_call.1} parent=63 // pred_check_branch
          %549 = sbr.rel (%p547) target = $region80
        $region79: #{tpu_custom_call.1} parent=63 // pred_region
          %551 = dma.done [#allocation9], 1024
        $region80: #{tpu_custom_call.1} parent=63 // pred_fallthru
          _
        // Predicated region
        $region81: #{tpu_custom_call.1} parent=63 // pred_check
          %p552 = pneg %p231
        $region82: #{tpu_custom_call.1} parent=63 // pred_check_branch
          %554 = sbr.rel (%p552) target = $region84
        $region83: #{tpu_custom_call.1} parent=63 // pred_region
          %556 = dma.done [#allocation9], 1024
        $region84: #{tpu_custom_call.1} parent=63 // pred_fallthru
          _
        // Predicated region
        $region85: #{tpu_custom_call.1} parent=63 // pred_check
          %p557 = pneg %p273
        $region86: #{tpu_custom_call.1} parent=63 // pred_check_branch
          %559 = sbr.rel (%p557) target = $region88
        $region87: #{tpu_custom_call.1} parent=63 // pred_region
          %561 = dma.done [#allocation12], 1024
        $region88: #{tpu_custom_call.1} parent=63 // pred_fallthru
          _
        %s562 = sand.u32 %s61, 1
        %s563 = scalar_lea.sflag [#allocation3], %s562
        %s564 = sand.u32 %s61, 1
        %s565 = smul.addr %s564, 128
        %s566 = scalar_lea.vmem [#allocation2], %s565
        %p567 = pneg %p74
        %p568 = pneg %p71
        %s569 = sand.u32 %s39, 1
        %s570 = scalar_lea.sflag [#allocation6], %s569
        %s571 = sand.u32 %s87, 1
        %s572 = scalar_lea.vmem [#allocation5], %s571
        %p573 = pneg %p100
        %p574 = pneg %p97
        %s575 = sand.u32 %s39, 1
        %s576 = scalar_lea.sflag [#allocation6], %s575
        %s577 = sand.u32 %s113, 1
        %s578 = scalar_lea.vmem [#allocation7], %s577
        %p579 = pneg %p126
        %p580 = pneg %p123
        %p581 = pneg %p147
        %p582 = pneg %p144
        %p583 = pneg %p168
        %p584 = pneg %p165
        %p585 = pneg %p189
        %p586 = pneg %p186
        %p587 = pneg %p210
        %p588 = pneg %p207
        %p589 = pneg %p231
        %p590 = pneg %p228
        %p591 = pneg %p252
        %p592 = pneg %p249
        %p593 = pneg %p273
        %p594 = pneg %p270
        %p595 = pneg %p294
        %p596 = pneg %p291
        %p597 = pneg %p322
        %p598 = pneg %p319
        %s599 = sand.u32 %s309, 1
        %s600 = scalar_lea.sflag [#allocation4], %s599
        %s601 = sand.u32 %s309, 1
        %s602 = smul.addr %s601, 64
        %s603 = scalar_lea.vmem [#allocation13], %s602
        %p604 = pneg %p350
        %p605 = pneg %p347
        %s606 = sand.u32 %s39, 1
        %s607 = scalar_lea.sflag [#allocation15], %s606
        %s608 = sand.u32 %s337, 1
        %s609 = smul.addr %s608, 64
        %s610 = scalar_lea.vmem [#allocation14], %s609
        %p611 = pneg %p378
        %p612 = pneg %p375
        %s613 = sand.u32 %s39, 1
        %s614 = scalar_lea.sflag [#allocation15], %s613
        %s615 = sand.u32 %s365, 1
        %s616 = smul.addr %s615, 64
        %s617 = scalar_lea.vmem [#allocation16], %s616
        %s618 = smul.u32 16, %s44
        %s619 = smul.u32 16, %s44
        %s620 = smul.u32 16, %s44
        %v621 = vld [vmem:[%s523] sm:$0xff]
        %v622 = vld [vmem:[%s523 + $0x8] sm:$0xff]
        %v623 = vld [vmem:[%s523 + $0x10] sm:$0xff]
        %v624 = vld [vmem:[%s523 + $0x18] sm:$0xff]
        %v625 = vld [vmem:[%s523 + $0x20] sm:$0xff]
        %v626 = vld [vmem:[%s523 + $0x28] sm:$0xff]
        %v627 = vld [vmem:[%s523 + $0x30] sm:$0xff]
        %v628 = vld [vmem:[%s523 + $0x38] sm:$0xff]
        %v629 = vld [vmem:[%s523 + $0x40] sm:$0xff]
        %v630 = vld [vmem:[%s523 + $0x48] sm:$0xff]
        %v631 = vld [vmem:[%s523 + $0x50] sm:$0xff]
        %v632 = vld [vmem:[%s523 + $0x58] sm:$0xff]
        %v633 = vld [vmem:[%s523 + $0x60] sm:$0xff]
        %v634 = vld [vmem:[%s523 + $0x68] sm:$0xff]
        %v635 = vld [vmem:[%s523 + $0x70] sm:$0xff]
        %v636 = vld [vmem:[%s523 + $0x78] sm:$0xff]
        %v637 = vld [vmem:[%s532] sm:$0x1]
        %v639 = vperm.slane %v637, 0
        %v641 = vsub.f32 %v621, %v639
        %v642 = vsub.f32 %v622, %v639
        %v643 = vsub.f32 %v623, %v639
        %v644 = vsub.f32 %v624, %v639
        %v645 = vsub.f32 %v625, %v639
        %v646 = vsub.f32 %v626, %v639
        %v647 = vsub.f32 %v627, %v639
        %v648 = vsub.f32 %v628, %v639
        %v649 = vsub.f32 %v629, %v639
        %v650 = vsub.f32 %v630, %v639
        %v651 = vsub.f32 %v631, %v639
        %v652 = vsub.f32 %v632, %v639
        %v653 = vsub.f32 %v633, %v639
        %v654 = vsub.f32 %v634, %v639
        %v655 = vsub.f32 %v635, %v639
        %v656 = vsub.f32 %v636, %v639
        %v657 = vld [vmem:[%s541] sm:$0x1]
        %v659 = vperm.slane %v657, 0
        %v661 = vmul.f32 %v641, %v659
        %v662 = vmul.f32 %v642, %v659
        %v663 = vmul.f32 %v643, %v659
        %v664 = vmul.f32 %v644, %v659
        %v665 = vmul.f32 %v645, %v659
        %v666 = vmul.f32 %v646, %v659
        %v667 = vmul.f32 %v647, %v659
        %v668 = vmul.f32 %v648, %v659
        %v669 = vmul.f32 %v649, %v659
        %v670 = vmul.f32 %v650, %v659
        %v671 = vmul.f32 %v651, %v659
        %v672 = vmul.f32 %v652, %v659
        %v673 = vmul.f32 %v653, %v659
        %v674 = vmul.f32 %v654, %v659
        %v675 = vmul.f32 %v655, %v659
        %v676 = vmul.f32 %v656, %v659
        %v677 = vld [vmem:[%s3] sm:$0x1]
        %v679 = vperm.slane %v677, 0
        %v681 = vmul.f32 %v661, %v679
        %v682 = vmul.f32 %v662, %v679
        %v683 = vmul.f32 %v663, %v679
        %v684 = vmul.f32 %v664, %v679
        %v685 = vmul.f32 %v665, %v679
        %v686 = vmul.f32 %v666, %v679
        %v687 = vmul.f32 %v667, %v679
        %v688 = vmul.f32 %v668, %v679
        %v689 = vmul.f32 %v669, %v679
        %v690 = vmul.f32 %v670, %v679
        %v691 = vmul.f32 %v671, %v679
        %v692 = vmul.f32 %v672, %v679
        %v693 = vmul.f32 %v673, %v679
        %v694 = vmul.f32 %v674, %v679
        %v695 = vmul.f32 %v675, %v679
        %v696 = vmul.f32 %v676, %v679
        %v697 = vld [vmem:[%s4] sm:$0x1]
        %v699 = vperm.slane %v697, 0
        %v701 = vadd.f32 %v681, %v699
        %v702 = vadd.f32 %v682, %v699
        %v703 = vadd.f32 %v683, %v699
        %v704 = vadd.f32 %v684, %v699
        %v705 = vadd.f32 %v685, %v699
        %v706 = vadd.f32 %v686, %v699
        %v707 = vadd.f32 %v687, %v699
        %v708 = vadd.f32 %v688, %v699
        %v709 = vadd.f32 %v689, %v699
        %v710 = vadd.f32 %v690, %v699
        %v711 = vadd.f32 %v691, %v699
        %v712 = vadd.f32 %v692, %v699
        %v713 = vadd.f32 %v693, %v699
        %v714 = vadd.f32 %v694, %v699
        %v715 = vadd.f32 %v695, %v699
        %v716 = vadd.f32 %v696, %v699
        %v717 = vpack.c.bf16 %v702, %v701
        %v718 = vpack.c.bf16 %v704, %v703
        %v719 = vpack.c.bf16 %v706, %v705
        %v720 = vpack.c.bf16 %v708, %v707
        %v721 = vpack.c.bf16 %v710, %v709
        %v722 = vpack.c.bf16 %v712, %v711
        %v723 = vpack.c.bf16 %v714, %v713
        %v724 = vpack.c.bf16 %v716, %v715
        %v725 = vld [vmem:[#allocation8] sm:$0xf]
        %v726 = vld [vmem:[#allocation8 + $0x4] sm:$0xf]
        %v727 = vld [vmem:[#allocation8 + $0x8] sm:$0xf]
        %v728 = vld [vmem:[#allocation8 + $0xc] sm:$0xf]
        %v729 = vld [vmem:[#allocation8 + $0x10] sm:$0xf]
        %v730 = vld [vmem:[#allocation8 + $0x14] sm:$0xf]
        %v731 = vld [vmem:[#allocation8 + $0x18] sm:$0xf]
        %v732 = vld [vmem:[#allocation8 + $0x1c] sm:$0xf]
        %v733 = vld [vmem:[#allocation8 + $0x20] sm:$0xf]
        %v734 = vld [vmem:[#allocation8 + $0x24] sm:$0xf]
        %v735 = vld [vmem:[#allocation8 + $0x28] sm:$0xf]
        %v736 = vld [vmem:[#allocation8 + $0x2c] sm:$0xf]
        %v737 = vld [vmem:[#allocation8 + $0x30] sm:$0xf]
        %v738 = vld [vmem:[#allocation8 + $0x34] sm:$0xf]
        %v739 = vld [vmem:[#allocation8 + $0x38] sm:$0xf]
        %v740 = vld [vmem:[#allocation8 + $0x3c] sm:$0xf]
        %v741 = vld [vmem:[%s6] sm:$0x1]
        %v743 = vperm.slane %v741, 0
        %v761 = vunpack.c.l.b16 %v725
        %v762 = vunpack.c.l.b16 %v726
        %v763 = vunpack.c.l.b16 %v727
        %v764 = vunpack.c.l.b16 %v728
        %v765 = vunpack.c.l.b16 %v729
        %v766 = vunpack.c.l.b16 %v730
        %v767 = vunpack.c.l.b16 %v731
        %v768 = vunpack.c.l.b16 %v732
        %v769 = vunpack.c.l.b16 %v733
        %v770 = vunpack.c.l.b16 %v734
        %v771 = vunpack.c.l.b16 %v735
        %v772 = vunpack.c.l.b16 %v736
        %v773 = vunpack.c.l.b16 %v737
        %v774 = vunpack.c.l.b16 %v738
        %v775 = vunpack.c.l.b16 %v739
        %v776 = vunpack.c.l.b16 %v740
        %v777 = vpack.c.b16 %v762, %v761
        %v778 = vpack.c.b16 %v764, %v763
        %v779 = vpack.c.b16 %v766, %v765
        %v780 = vpack.c.b16 %v768, %v767
        %v781 = vpack.c.b16 %v770, %v769
        %v782 = vpack.c.b16 %v772, %v771
        %v783 = vpack.c.b16 %v774, %v773
        %v784 = vpack.c.b16 %v776, %v775
        %793 = vmatpush.bf16.msra.mxu0 %v784
        %794 = vmatpush.bf16.msra.mxu0 %v783
        %795 = vmatpush.bf16.msra.mxu0 %v782
        %796 = vmatpush.bf16.msra.mxu0 %v781
        %797 = vmatpush.bf16.msra.mxu0 %v780
        %798 = vmatpush.bf16.msra.mxu0 %v779
        %799 = vmatpush.bf16.msra.mxu0 %v778
        %800 = vmatpush.bf16.msra.mxu0 %v777
        %801 = vmatmul.bf16.gmra.mxu0 %v717
        %v802 = vpop.f32.mrf.mxu0
        %v803 = vadd.f32 %v743, %v802
        %v804 = vpop.f32.mrf.mxu0
        %v805 = vadd.f32 %v743, %v804
        %806 = vmatmul.bf16.gmra.mxu0 %v718
        %v807 = vpop.f32.mrf.mxu0
        %v808 = vadd.f32 %v743, %v807
        %v809 = vpop.f32.mrf.mxu0
        %v810 = vadd.f32 %v743, %v809
        %811 = vmatmul.bf16.gmra.mxu0 %v719
        %v812 = vpop.f32.mrf.mxu0
        %v813 = vadd.f32 %v743, %v812
        %v814 = vpop.f32.mrf.mxu0
        %v815 = vadd.f32 %v743, %v814
        %816 = vmatmul.bf16.gmra.mxu0 %v720
        %v817 = vpop.f32.mrf.mxu0
        %v818 = vadd.f32 %v743, %v817
        %v819 = vpop.f32.mrf.mxu0
        %v820 = vadd.f32 %v743, %v819
        %821 = vmatmul.bf16.gmra.mxu0 %v721
        %v822 = vpop.f32.mrf.mxu0
        %v823 = vadd.f32 %v743, %v822
        %v824 = vpop.f32.mrf.mxu0
        %v825 = vadd.f32 %v743, %v824
        %826 = vmatmul.bf16.gmra.mxu0 %v722
        %v827 = vpop.f32.mrf.mxu0
        %v828 = vadd.f32 %v743, %v827
        %v829 = vpop.f32.mrf.mxu0
        %v830 = vadd.f32 %v743, %v829
        %831 = vmatmul.bf16.gmra.mxu0 %v723
        %v832 = vpop.f32.mrf.mxu0
        %v833 = vadd.f32 %v743, %v832
        %v834 = vpop.f32.mrf.mxu0
        %v835 = vadd.f32 %v743, %v834
        %836 = vmatmul.bf16.gmra.mxu0 %v724
        %v837 = vpop.f32.mrf.mxu0
        %v838 = vadd.f32 %v743, %v837
        %v839 = vpop.f32.mrf.mxu0
        %v840 = vadd.f32 %v743, %v839
        %841 = vdwg.mxu0
        %v842 = vld [vmem:[#allocation10] sm:$0xf]
        %v843 = vld [vmem:[#allocation10 + $0x4] sm:$0xf]
        %v844 = vld [vmem:[#allocation10 + $0x8] sm:$0xf]
        %v845 = vld [vmem:[#allocation10 + $0xc] sm:$0xf]
        %v846 = vld [vmem:[#allocation10 + $0x10] sm:$0xf]
        %v847 = vld [vmem:[#allocation10 + $0x14] sm:$0xf]
        %v848 = vld [vmem:[#allocation10 + $0x18] sm:$0xf]
        %v849 = vld [vmem:[#allocation10 + $0x1c] sm:$0xf]
        %v850 = vld [vmem:[#allocation10 + $0x20] sm:$0xf]
        %v851 = vld [vmem:[#allocation10 + $0x24] sm:$0xf]
        %v852 = vld [vmem:[#allocation10 + $0x28] sm:$0xf]
        %v853 = vld [vmem:[#allocation10 + $0x2c] sm:$0xf]
        %v854 = vld [vmem:[#allocation10 + $0x30] sm:$0xf]
        %v855 = vld [vmem:[#allocation10 + $0x34] sm:$0xf]
        %v856 = vld [vmem:[#allocation10 + $0x38] sm:$0xf]
        %v857 = vld [vmem:[#allocation10 + $0x3c] sm:$0xf]
        %v858 = vld [vmem:[%s8] sm:$0x1]
        %v860 = vperm.slane %v858, 0
        %v878 = vunpack.c.l.b16 %v842
        %v879 = vunpack.c.l.b16 %v843
        %v880 = vunpack.c.l.b16 %v844
        %v881 = vunpack.c.l.b16 %v845
        %v882 = vunpack.c.l.b16 %v846
        %v883 = vunpack.c.l.b16 %v847
        %v884 = vunpack.c.l.b16 %v848
        %v885 = vunpack.c.l.b16 %v849
        %v886 = vunpack.c.l.b16 %v850
        %v887 = vunpack.c.l.b16 %v851
        %v888 = vunpack.c.l.b16 %v852
        %v889 = vunpack.c.l.b16 %v853
        %v890 = vunpack.c.l.b16 %v854
        %v891 = vunpack.c.l.b16 %v855
        %v892 = vunpack.c.l.b16 %v856
        %v893 = vunpack.c.l.b16 %v857
        %v894 = vpack.c.b16 %v879, %v878
        %v895 = vpack.c.b16 %v881, %v880
        %v896 = vpack.c.b16 %v883, %v882
        %v897 = vpack.c.b16 %v885, %v884
        %v898 = vpack.c.b16 %v887, %v886
        %v899 = vpack.c.b16 %v889, %v888
        %v900 = vpack.c.b16 %v891, %v890
        %v901 = vpack.c.b16 %v893, %v892
        %910 = vmatpush.bf16.msra.mxu0 %v901
        %911 = vmatpush.bf16.msra.mxu0 %v900
        %912 = vmatpush.bf16.msra.mxu0 %v899
        %913 = vmatpush.bf16.msra.mxu0 %v898
        %914 = vmatpush.bf16.msra.mxu0 %v897
        %915 = vmatpush.bf16.msra.mxu0 %v896
        %916 = vmatpush.bf16.msra.mxu0 %v895
        %917 = vmatpush.bf16.msra.mxu0 %v894
        %918 = vmatmul.bf16.gmra.mxu0 %v717
        %v919 = vpop.f32.mrf.mxu0
        %v920 = vadd.f32 %v860, %v919
        %v921 = vpop.f32.mrf.mxu0
        %v922 = vadd.f32 %v860, %v921
        %923 = vmatmul.bf16.gmra.mxu0 %v718
        %v924 = vpop.f32.mrf.mxu0
        %v925 = vadd.f32 %v860, %v924
        %v926 = vpop.f32.mrf.mxu0
        %v927 = vadd.f32 %v860, %v926
        %928 = vmatmul.bf16.gmra.mxu0 %v719
        %v929 = vpop.f32.mrf.mxu0
        %v930 = vadd.f32 %v860, %v929
        %v931 = vpop.f32.mrf.mxu0
        %v932 = vadd.f32 %v860, %v931
        %933 = vmatmul.bf16.gmra.mxu0 %v720
        %v934 = vpop.f32.mrf.mxu0
        %v935 = vadd.f32 %v860, %v934
        %v936 = vpop.f32.mrf.mxu0
        %v937 = vadd.f32 %v860, %v936
        %938 = vmatmul.bf16.gmra.mxu0 %v721
        %v939 = vpop.f32.mrf.mxu0
        %v940 = vadd.f32 %v860, %v939
        %v941 = vpop.f32.mrf.mxu0
        %v942 = vadd.f32 %v860, %v941
        %943 = vmatmul.bf16.gmra.mxu0 %v722
        %v944 = vpop.f32.mrf.mxu0
        %v945 = vadd.f32 %v860, %v944
        %v946 = vpop.f32.mrf.mxu0
        %v947 = vadd.f32 %v860, %v946
        %948 = vmatmul.bf16.gmra.mxu0 %v723
        %v949 = vpop.f32.mrf.mxu0
        %v950 = vadd.f32 %v860, %v949
        %v951 = vpop.f32.mrf.mxu0
        %v952 = vadd.f32 %v860, %v951
        %953 = vmatmul.bf16.gmra.mxu0 %v724
        %v954 = vpop.f32.mrf.mxu0
        %v955 = vadd.f32 %v860, %v954
        %v956 = vpop.f32.mrf.mxu0
        %v957 = vadd.f32 %v860, %v956
        %958 = vdwg.mxu0
        %v959 = vld [vmem:[#allocation11] sm:$0xf]
        %v960 = vld [vmem:[#allocation11 + $0x4] sm:$0xf]
        %v961 = vld [vmem:[#allocation11 + $0x8] sm:$0xf]
        %v962 = vld [vmem:[#allocation11 + $0xc] sm:$0xf]
        %v963 = vld [vmem:[#allocation11 + $0x10] sm:$0xf]
        %v964 = vld [vmem:[#allocation11 + $0x14] sm:$0xf]
        %v965 = vld [vmem:[#allocation11 + $0x18] sm:$0xf]
        %v966 = vld [vmem:[#allocation11 + $0x1c] sm:$0xf]
        %v967 = vld [vmem:[#allocation11 + $0x20] sm:$0xf]
        %v968 = vld [vmem:[#allocation11 + $0x24] sm:$0xf]
        %v969 = vld [vmem:[#allocation11 + $0x28] sm:$0xf]
        %v970 = vld [vmem:[#allocation11 + $0x2c] sm:$0xf]
        %v971 = vld [vmem:[#allocation11 + $0x30] sm:$0xf]
        %v972 = vld [vmem:[#allocation11 + $0x34] sm:$0xf]
        %v973 = vld [vmem:[#allocation11 + $0x38] sm:$0xf]
        %v974 = vld [vmem:[#allocation11 + $0x3c] sm:$0xf]
        %v975 = vld [vmem:[%s10] sm:$0x1]
        %v977 = vperm.slane %v975, 0
        %v995 = vunpack.c.l.b16 %v959
        %v996 = vunpack.c.l.b16 %v960
        %v997 = vunpack.c.l.b16 %v961
        %v998 = vunpack.c.l.b16 %v962
        %v999 = vunpack.c.l.b16 %v963
        %v1000 = vunpack.c.l.b16 %v964
        %v1001 = vunpack.c.l.b16 %v965
        %v1002 = vunpack.c.l.b16 %v966
        %v1003 = vunpack.c.l.b16 %v967
        %v1004 = vunpack.c.l.b16 %v968
        %v1005 = vunpack.c.l.b16 %v969
        %v1006 = vunpack.c.l.b16 %v970
        %v1007 = vunpack.c.l.b16 %v971
        %v1008 = vunpack.c.l.b16 %v972
        %v1009 = vunpack.c.l.b16 %v973
        %v1010 = vunpack.c.l.b16 %v974
        %v1011 = vpack.c.b16 %v996, %v995
        %v1012 = vpack.c.b16 %v998, %v997
        %v1013 = vpack.c.b16 %v1000, %v999
        %v1014 = vpack.c.b16 %v1002, %v1001
        %v1015 = vpack.c.b16 %v1004, %v1003
        %v1016 = vpack.c.b16 %v1006, %v1005
        %v1017 = vpack.c.b16 %v1008, %v1007
        %v1018 = vpack.c.b16 %v1010, %v1009
        %1027 = vmatpush.bf16.msra.mxu0 %v1018
        %1028 = vmatpush.bf16.msra.mxu0 %v1017
        %1029 = vmatpush.bf16.msra.mxu0 %v1016
        %1030 = vmatpush.bf16.msra.mxu0 %v1015
        %1031 = vmatpush.bf16.msra.mxu0 %v1014
        %1032 = vmatpush.bf16.msra.mxu0 %v1013
        %1033 = vmatpush.bf16.msra.mxu0 %v1012
        %1034 = vmatpush.bf16.msra.mxu0 %v1011
        %1035 = vmatmul.bf16.gmra.mxu0 %v717
        %v1036 = vpop.f32.mrf.mxu0
        %v1037 = vadd.f32 %v977, %v1036
        %v1038 = vpop.f32.mrf.mxu0
        %v1039 = vadd.f32 %v977, %v1038
        %1040 = vmatmul.bf16.gmra.mxu0 %v718
        %v1041 = vpop.f32.mrf.mxu0
        %v1042 = vadd.f32 %v977, %v1041
        %v1043 = vpop.f32.mrf.mxu0
        %v1044 = vadd.f32 %v977, %v1043
        %1045 = vmatmul.bf16.gmra.mxu0 %v719
        %v1046 = vpop.f32.mrf.mxu0
        %v1047 = vadd.f32 %v977, %v1046
        %v1048 = vpop.f32.mrf.mxu0
        %v1049 = vadd.f32 %v977, %v1048
        %1050 = vmatmul.bf16.gmra.mxu0 %v720
        %v1051 = vpop.f32.mrf.mxu0
        %v1052 = vadd.f32 %v977, %v1051
        %v1053 = vpop.f32.mrf.mxu0
        %v1054 = vadd.f32 %v977, %v1053
        %1055 = vmatmul.bf16.gmra.mxu0 %v721
        %v1056 = vpop.f32.mrf.mxu0
        %v1057 = vadd.f32 %v977, %v1056
        %v1058 = vpop.f32.mrf.mxu0
        %v1059 = vadd.f32 %v977, %v1058
        %1060 = vmatmul.bf16.gmra.mxu0 %v722
        %v1061 = vpop.f32.mrf.mxu0
        %v1062 = vadd.f32 %v977, %v1061
        %v1063 = vpop.f32.mrf.mxu0
        %v1064 = vadd.f32 %v977, %v1063
        %1065 = vmatmul.bf16.gmra.mxu0 %v723
        %v1066 = vpop.f32.mrf.mxu0
        %v1067 = vadd.f32 %v977, %v1066
        %v1068 = vpop.f32.mrf.mxu0
        %v1069 = vadd.f32 %v977, %v1068
        %1070 = vmatmul.bf16.gmra.mxu0 %v724
        %v1071 = vpop.f32.mrf.mxu0
        %v1072 = vadd.f32 %v977, %v1071
        %v1073 = vpop.f32.mrf.mxu0
        %v1074 = vadd.f32 %v977, %v1073
        %1075 = vdwg.mxu0
        %v1076 = vpack.c.bf16 %v803, %v803
        %v1077 = vpack.c.bf16 %v805, %v805
        %v1078 = vpack.c.bf16 %v808, %v808
        %v1079 = vpack.c.bf16 %v810, %v810
        %v1080 = vpack.c.bf16 %v813, %v813
        %v1081 = vpack.c.bf16 %v815, %v815
        %v1082 = vpack.c.bf16 %v818, %v818
        %v1083 = vpack.c.bf16 %v820, %v820
        %v1084 = vpack.c.bf16 %v823, %v823
        %v1085 = vpack.c.bf16 %v825, %v825
        %v1086 = vpack.c.bf16 %v828, %v828
        %v1087 = vpack.c.bf16 %v830, %v830
        %v1088 = vpack.c.bf16 %v833, %v833
        %v1089 = vpack.c.bf16 %v835, %v835
        %v1090 = vpack.c.bf16 %v838, %v838
        %v1091 = vpack.c.bf16 %v840, %v840
        %1092 = vst [vmem:[%s603] sm:$0xf] %v1076
        %1093 = vst [vmem:[%s603 + $0x4] sm:$0xf] %v1077
        %1094 = vst [vmem:[%s603 + $0x8] sm:$0xf] %v1078
        %1095 = vst [vmem:[%s603 + $0xc] sm:$0xf] %v1079
        %1096 = vst [vmem:[%s603 + $0x10] sm:$0xf] %v1080
        %1097 = vst [vmem:[%s603 + $0x14] sm:$0xf] %v1081
        %1098 = vst [vmem:[%s603 + $0x18] sm:$0xf] %v1082
        %1099 = vst [vmem:[%s603 + $0x1c] sm:$0xf] %v1083
        %1100 = vst [vmem:[%s603 + $0x20] sm:$0xf] %v1084
        %1101 = vst [vmem:[%s603 + $0x24] sm:$0xf] %v1085
        %1102 = vst [vmem:[%s603 + $0x28] sm:$0xf] %v1086
        %1103 = vst [vmem:[%s603 + $0x2c] sm:$0xf] %v1087
        %1104 = vst [vmem:[%s603 + $0x30] sm:$0xf] %v1088
        %1105 = vst [vmem:[%s603 + $0x34] sm:$0xf] %v1089
        %1106 = vst [vmem:[%s603 + $0x38] sm:$0xf] %v1090
        %1107 = vst [vmem:[%s603 + $0x3c] sm:$0xf] %v1091
        %1108 = vxpose.xlu0.b32.start [1/16] %v920, 128
        %1109 = vxpose.xlu0.b32.cont [2/16] %v922, 128
        %1110 = vxpose.xlu0.b32.cont [3/16] %v925, 128
        %1111 = vxpose.xlu0.b32.cont [4/16] %v927, 128
        %1112 = vxpose.xlu0.b32.cont [5/16] %v930, 128
        %1113 = vxpose.xlu0.b32.cont [6/16] %v932, 128
        %1114 = vxpose.xlu0.b32.cont [7/16] %v935, 128
        %1115 = vxpose.xlu0.b32.cont [8/16] %v937, 128
        %1116 = vxpose.xlu0.b32.cont [9/16] %v940, 128
        %1117 = vxpose.xlu0.b32.cont [10/16] %v942, 128
        %1118 = vxpose.xlu0.b32.cont [11/16] %v945, 128
        %1119 = vxpose.xlu0.b32.cont [12/16] %v947, 128
        %1120 = vxpose.xlu0.b32.cont [13/16] %v950, 128
        %1121 = vxpose.xlu0.b32.cont [14/16] %v952, 128
        %1122 = vxpose.xlu0.b32.cont [15/16] %v955, 128
        %1123 = vxpose.xlu0.b32.end [16/16] %v957, 128
        %v1124 = vpop.trf.xlu0
        %v1125 = vpop.trf.xlu0
        %v1126 = vpop.trf.xlu0
        %v1127 = vpop.trf.xlu0
        %v1128 = vpop.trf.xlu0
        %v1129 = vpop.trf.xlu0
        %v1130 = vpop.trf.xlu0
        %v1131 = vpop.trf.xlu0
        %v1132 = vpop.trf.xlu0
        %v1133 = vpop.trf.xlu0
        %v1134 = vpop.trf.xlu0
        %v1135 = vpop.trf.xlu0
        %v1136 = vpop.trf.xlu0
        %v1137 = vpop.trf.xlu0
        %v1138 = vpop.trf.xlu0
        %v1139 = vpop.trf.xlu0
        %v1140 = vpack.c.bf16 %v1124, %v1124
        %v1141 = vpack.c.bf16 %v1125, %v1125
        %v1142 = vpack.c.bf16 %v1126, %v1126
        %v1143 = vpack.c.bf16 %v1127, %v1127
        %v1144 = vpack.c.bf16 %v1128, %v1128
        %v1145 = vpack.c.bf16 %v1129, %v1129
        %v1146 = vpack.c.bf16 %v1130, %v1130
        %v1147 = vpack.c.bf16 %v1131, %v1131
        %v1148 = vpack.c.bf16 %v1132, %v1132
        %v1149 = vpack.c.bf16 %v1133, %v1133
        %v1150 = vpack.c.bf16 %v1134, %v1134
        %v1151 = vpack.c.bf16 %v1135, %v1135
        %v1152 = vpack.c.bf16 %v1136, %v1136
        %v1153 = vpack.c.bf16 %v1137, %v1137
        %v1154 = vpack.c.bf16 %v1138, %v1138
        %v1155 = vpack.c.bf16 %v1139, %v1139
        %1156 = vst [vmem:[%s610] sm:$0xf] %v1140
        %1157 = vst [vmem:[%s610 + $0x4] sm:$0xf] %v1141
        %1158 = vst [vmem:[%s610 + $0x8] sm:$0xf] %v1142
        %1159 = vst [vmem:[%s610 + $0xc] sm:$0xf] %v1143
        %1160 = vst [vmem:[%s610 + $0x10] sm:$0xf] %v1144
        %1161 = vst [vmem:[%s610 + $0x14] sm:$0xf] %v1145
        %1162 = vst [vmem:[%s610 + $0x18] sm:$0xf] %v1146
        %1163 = vst [vmem:[%s610 + $0x1c] sm:$0xf] %v1147
        %1164 = vst [vmem:[%s610 + $0x20] sm:$0xf] %v1148
        %1165 = vst [vmem:[%s610 + $0x24] sm:$0xf] %v1149
        %1166 = vst [vmem:[%s610 + $0x28] sm:$0xf] %v1150
        %1167 = vst [vmem:[%s610 + $0x2c] sm:$0xf] %v1151
        %1168 = vst [vmem:[%s610 + $0x30] sm:$0xf] %v1152
        %1169 = vst [vmem:[%s610 + $0x34] sm:$0xf] %v1153
        %1170 = vst [vmem:[%s610 + $0x38] sm:$0xf] %v1154
        %1171 = vst [vmem:[%s610 + $0x3c] sm:$0xf] %v1155
        %v1172 = vpack.c.bf16 %v1037, %v1037
        %v1173 = vpack.c.bf16 %v1039, %v1039
        %v1174 = vpack.c.bf16 %v1042, %v1042
        %v1175 = vpack.c.bf16 %v1044, %v1044
        %v1176 = vpack.c.bf16 %v1047, %v1047
        %v1177 = vpack.c.bf16 %v1049, %v1049
        %v1178 = vpack.c.bf16 %v1052, %v1052
        %v1179 = vpack.c.bf16 %v1054, %v1054
        %v1180 = vpack.c.bf16 %v1057, %v1057
        %v1181 = vpack.c.bf16 %v1059, %v1059
        %v1182 = vpack.c.bf16 %v1062, %v1062
        %v1183 = vpack.c.bf16 %v1064, %v1064
        %v1184 = vpack.c.bf16 %v1067, %v1067
        %v1185 = vpack.c.bf16 %v1069, %v1069
        %v1186 = vpack.c.bf16 %v1072, %v1072
        %v1187 = vpack.c.bf16 %v1074, %v1074
        %1188 = vst [vmem:[%s617] sm:$0xf] %v1172
        %1189 = vst [vmem:[%s617 + $0x4] sm:$0xf] %v1173
        %1190 = vst [vmem:[%s617 + $0x8] sm:$0xf] %v1174
        %1191 = vst [vmem:[%s617 + $0xc] sm:$0xf] %v1175
        %1192 = vst [vmem:[%s617 + $0x10] sm:$0xf] %v1176
        %1193 = vst [vmem:[%s617 + $0x14] sm:$0xf] %v1177
        %1194 = vst [vmem:[%s617 + $0x18] sm:$0xf] %v1178
        %1195 = vst [vmem:[%s617 + $0x1c] sm:$0xf] %v1179
        %1196 = vst [vmem:[%s617 + $0x20] sm:$0xf] %v1180
        %1197 = vst [vmem:[%s617 + $0x24] sm:$0xf] %v1181
        %1198 = vst [vmem:[%s617 + $0x28] sm:$0xf] %v1182
        %1199 = vst [vmem:[%s617 + $0x2c] sm:$0xf] %v1183
        %1200 = vst [vmem:[%s617 + $0x30] sm:$0xf] %v1184
        %1201 = vst [vmem:[%s617 + $0x34] sm:$0xf] %v1185
        %1202 = vst [vmem:[%s617 + $0x38] sm:$0xf] %v1186
        %1203 = vst [vmem:[%s617 + $0x3c] sm:$0xf] %v1187
        %s1204 = sand.u32 %s309, 1
        %s1205 = scalar_lea.sflag [#allocation4], %s1204
        %s1206 = sand.u32 %s309, 1
        %s1207 = smul.addr %s1206, 64
        %s1208 = scalar_lea.vmem [#allocation13], %s1207
        %s1209 = sand.u32 %s39, 1
        %s1210 = scalar_lea.sflag [#allocation15], %s1209
        %s1211 = sand.u32 %s337, 1
        %s1212 = smul.addr %s1211, 64
        %s1213 = scalar_lea.vmem [#allocation14], %s1212
        %s1214 = sand.u32 %s39, 1
        %s1215 = scalar_lea.sflag [#allocation15], %s1214
        %s1216 = sand.u32 %s365, 1
        %s1217 = smul.addr %s1216, 64
        %s1218 = scalar_lea.vmem [#allocation16], %s1217
        // Predicated region
        $region89: #{tpu_custom_call.1} parent=63 // pred_check
          %p1219 = pneg %p319
        $region90: #{tpu_custom_call.1} parent=63 // pred_check_branch
          %1221 = sbr.rel (%p1219) target = $region92
        $region91: #{tpu_custom_call.1} parent=63 // pred_region
          %s1222 = smul.u32 16, %s44
          %1224 = vsyncadd %s1205, 0
          %s1225 = smul.addr %s43, 32
          %s1226 = sadd.s32 %s1222, %s1225
          %s1227 = smul.addr %s1226, 4
          %s1228 = scalar_lea.hbm %s11, %s1227
          %s1229 = sshll.u32 %s1208, 4
          %s1230 = int_to_ptr.vmem [resolvable:$true] %s1229
          %s1231 = sshll.u32 %s1228, 4
          %s1232 = int_to_ptr.hbm [resolvable:$true] %s1231
          %1237 = dma.vmem_to_hbm [thread:$0]  %s1230, 1024, %s1232, %s1205, 64, 64, 4
        $region92: #{tpu_custom_call.1} parent=63 // pred_fallthru
          _
        // Predicated region
        $region93: #{tpu_custom_call.1} parent=63 // pred_check
          %p1238 = pneg %p347
        $region94: #{tpu_custom_call.1} parent=63 // pred_check_branch
          %1240 = sbr.rel (%p1238) target = $region96
        $region95: #{tpu_custom_call.1} parent=63 // pred_region
          %1242 = vsyncadd %s1210, 0
          %s1243 = smul.addr %s43, 32
          %s1244 = sadd.s32 %s44, %s1243
          %s1245 = smul.addr %s1244, 4
          %s1246 = scalar_lea.hbm %s12, %s1245
          %s1247 = sshll.u32 %s1213, 4
          %s1248 = int_to_ptr.vmem [resolvable:$true] %s1247
          %s1249 = sshll.u32 %s1246, 4
          %s1250 = int_to_ptr.hbm [resolvable:$true] %s1249
          %1255 = dma.vmem_to_hbm [thread:$0]  %s1248, 1024, %s1250, %s1210, 64, 128, 4
        $region96: #{tpu_custom_call.1} parent=63 // pred_fallthru
          _
        // Predicated region
        $region97: #{tpu_custom_call.1} parent=63 // pred_check
          %p1256 = pneg %p375
        $region98: #{tpu_custom_call.1} parent=63 // pred_check_branch
          %1258 = sbr.rel (%p1256) target = $region100
        $region99: #{tpu_custom_call.1} parent=63 // pred_region
          %s1259 = smul.u32 16, %s44
          %1261 = vsyncadd %s1215, 0
          %s1262 = smul.addr %s43, 32
          %s1263 = sadd.s32 %s1259, %s1262
          %s1264 = smul.addr %s1263, 4
          %s1265 = scalar_lea.hbm %s13, %s1264
          %s1266 = sshll.u32 %s1218, 4
          %s1267 = int_to_ptr.vmem [resolvable:$true] %s1266
          %s1268 = sshll.u32 %s1265, 4
          %s1269 = int_to_ptr.hbm [resolvable:$true] %s1268
          %1274 = dma.vmem_to_hbm [thread:$0]  %s1267, 1024, %s1269, %s1215, 64, 64, 4
        $region100: #{tpu_custom_call.1} parent=63 // pred_fallthru
          _
      $region64: #{tpu_custom_call.1} parent=5 // pred_fallthru
        _
      %p1275 = scmp.le.s32.totalorder 2, %s34
      // Predicated region
      $region101: #{tpu_custom_call.1} parent=5 // pred_check
        %p1276 = pneg %p1275
      $region102: #{tpu_custom_call.1} parent=5 // pred_check_branch
        %1278 = sbr.rel (%p1276) target = $region104
      $region103: #{tpu_custom_call.1} parent=5 // pred_region
        %s1279 = ssub.s32 %s34, 2
        // Predicated region
        $region105: #{tpu_custom_call.1} parent=103 // pred_check
          %p1280 = pneg %p325
        $region106: #{tpu_custom_call.1} parent=103 // pred_check_branch
          %1282 = sbr.rel (%p1280) target = $region108
        $region107: #{tpu_custom_call.1} parent=103 // pred_region
          %s1283 = sand.u32 %s310, 1
          %s1284 = scalar_lea.sflag [#allocation4], %s1283
          %s1285 = sand.u32 %s310, 1
          %s1286 = smul.addr %s1285, 64
          %s1287 = scalar_lea.vmem [#allocation13], %s1286
          %1289 = dma.done %s1284, 1024
        $region108: #{tpu_custom_call.1} parent=103 // pred_fallthru
          _
        // Predicated region
        $region109: #{tpu_custom_call.1} parent=103 // pred_check
          %p1290 = pneg %p353
        $region110: #{tpu_custom_call.1} parent=103 // pred_check_branch
          %1292 = sbr.rel (%p1290) target = $region112
        $region111: #{tpu_custom_call.1} parent=103 // pred_region
          %s1293 = sand.u32 %s40, 1
          %s1294 = scalar_lea.sflag [#allocation15], %s1293
          %s1295 = sand.u32 %s338, 1
          %s1296 = smul.addr %s1295, 64
          %s1297 = scalar_lea.vmem [#allocation14], %s1296
          %1299 = dma.done %s1294, 1024
        $region112: #{tpu_custom_call.1} parent=103 // pred_fallthru
          _
        // Predicated region
        $region113: #{tpu_custom_call.1} parent=103 // pred_check
          %p1300 = pneg %p381
        $region114: #{tpu_custom_call.1} parent=103 // pred_check_branch
          %1302 = sbr.rel (%p1300) target = $region116
        $region115: #{tpu_custom_call.1} parent=103 // pred_region
          %s1303 = sand.u32 %s40, 1
          %s1304 = scalar_lea.sflag [#allocation15], %s1303
          %s1305 = sand.u32 %s366, 1
          %s1306 = smul.addr %s1305, 64
          %s1307 = scalar_lea.vmem [#allocation16], %s1306
          %1309 = dma.done %s1304, 1024
        $region116: #{tpu_custom_call.1} parent=103 // pred_fallthru
          _
      $region104: #{tpu_custom_call.1} parent=5 // pred_fallthru
        _
    $region6: #{tpu_custom_call.1} parent=1 // loop_footer
      %s38 = sadd.s32 1, %s34
    $region7: #{tpu_custom_call.1} parent=1 // loop_footer_branch
      %33 = sbr.rel target = $region3
    $region8: #{tpu_custom_call.1} parent=1 // loop_exit
      _
    %1310 = vsyncpa [#allocation3], 1
    %s1311 = scalar_lea.sflag [#allocation3], 1
    %1312 = vsyncpa %s1311, 1
    %1313 = vsyncpa [#allocation6], 1
    %s1314 = scalar_lea.sflag [#allocation6], 1
    %1315 = vsyncpa %s1314, 1
    %1316 = vsyncpa [#allocation9], 1
    %1317 = vsyncpa [#allocation12], 1
    %1318 = vsyncpa [#allocation4], 1
    %s1319 = scalar_lea.sflag [#allocation4], 1
    %1320 = vsyncpa %s1319, 1
    %1321 = vsyncpa [#allocation15], 1
    %s1322 = scalar_lea.sflag [#allocation15], 1
    %1323 = vsyncpa %s1322, 1

</llo_original>
